<compile_context>
chip_gen: v6e
topology: v6e:2x2x1
jax: 0.10.0
libtpu: 0.0.40
codegen_flags: <defaults>
</compile_context>

<pallas_src>
import jax
import jax.numpy as jnp
from jax.experimental import pallas as pl
from jax.experimental.pallas import tpu as pltpu

_NEG_SLOPE = 0.2   # nn.LeakyReLU(negative_slope=0.2)
_BN_EPS = 1e-5     # nn.BatchNorm1d default eps
_C_FEAT = 1056     # backbone feature channels
_N_POS = 9         # cropped spatial positions (3x3)
_H1 = 256          # FC1 output width
_H2 = 9            # FC2 output width


def _vmem_spec():
    return pl.BlockSpec(memory_space=pltpu.MemorySpace.VMEM)


# ---------------------------------------------------------------------------
# Fused kernel, grid=(9,) over cropped spatial positions p:
#   per-position linear patch embedding (backbone stand-in)
#   -> FC1 partial dot against the pipelined (1056, 256) w1 tile, accumulated
#      into a VMEM scratch
#   epilogue (last position): BN1 -> LeakyReLU -> FC2 -> BN2 -> LeakyReLU
#   -> concat(knn) -> FC3 -> Softmax(dim=1)
# ---------------------------------------------------------------------------
def _fused_kernel(patches_ref, w1_ref, knn_ref,
                  wf_ref, bf_ref,
                  b1_ref, g1_ref, be1_ref,
                  w2_ref, b2_ref, g2_ref, be2_ref,
                  w3_ref, b3_ref,
                  o_ref, acc_ref):
    p = pl.program_id(0)

    @pl.when(p == 0)
    def _():
        acc_ref[...] = jnp.zeros_like(acc_ref)

    # Patch embedding for this position: (B, 48) @ (48, 1056) + bias
    emb = (
        jnp.dot(patches_ref[0], wf_ref[...], preferred_element_type=jnp.float32)
        + bf_ref[...]
    )
    # FC1 partial contribution against this position's (1056, 256) weight tile.
    acc_ref[...] += jnp.dot(emb, w1_ref[0], preferred_element_type=jnp.float32)

    @pl.when(p == pl.num_programs(0) - 1)
    def _():
        h1 = acc_ref[...] + b1_ref[...]

        # BN1 (train-mode batch statistics) + LeakyReLU(0.2)
        mu1 = jnp.mean(h1, axis=0, keepdims=True)
        var1 = jnp.mean((h1 - mu1) ** 2, axis=0, keepdims=True)
        h1 = (h1 - mu1) * jax.lax.rsqrt(var1 + _BN_EPS) * g1_ref[...] + be1_ref[...]
        h1 = jnp.where(h1 > 0, h1, _NEG_SLOPE * h1)

        # FC2 + BN2 + LeakyReLU(0.2)
        h2 = jnp.dot(h1, w2_ref[...], preferred_element_type=jnp.float32) + b2_ref[...]
        mu2 = jnp.mean(h2, axis=0, keepdims=True)
        var2 = jnp.mean((h2 - mu2) ** 2, axis=0, keepdims=True)
        h2 = (h2 - mu2) * jax.lax.rsqrt(var2 + _BN_EPS) * g2_ref[...] + be2_ref[...]
        h2 = jnp.where(h2 > 0, h2, _NEG_SLOPE * h2)

        # cat([h2, knn], dim=1) @ W3 + b3  ==  h2 @ W3[:9] + knn * W3[9:10] + b3
        w3 = w3_ref[...]
        logits = (
            jnp.dot(h2, w3[:_H2, :], preferred_element_type=jnp.float32)
            + knn_ref[...] * w3[_H2:_H2 + 1, :]
            + b3_ref[...]
        )

        # Softmax over dim=1 (classes)
        m = jnp.max(logits, axis=1, keepdims=True)
        e = jnp.exp(logits - m)
        o_ref[...] = e / jnp.sum(e, axis=1, keepdims=True)


def nasnet_wrapper_forward(input_images, input_knn, params):
    """params must be the output of prepare_params() (position-major (9,1056,256) w1)."""
    B, C, H, W = input_images.shape
    ph, pw = H // 7, W // 7
    num_classes = params["w3"].shape[1]

    # Only the 9 center output positions (h,w in {2,3,4}) survive the crop, so
    # extract exactly those 4x4 patches, position-major: (9, B, C*ph*pw).
    center = input_images[:, :, 2 * ph:5 * ph, 2 * pw:5 * pw]
    patches = center.reshape(B, C, 3, ph, 3, pw)
    patches = patches.transpose(2, 4, 0, 1, 3, 5).reshape(_N_POS, B, C * ph * pw)

    knn2 = input_knn.reshape(-1, 1).astype(jnp.float32)   # torch.unsqueeze(knn, 1)

    patch_feat = C * ph * pw

    return pl.pallas_call(
        _fused_kernel,
        out_shape=jax.ShapeDtypeStruct((B, num_classes), jnp.float32),
        grid=(_N_POS,),
        in_specs=[
            # Pipelined per-position inputs (double-buffered by Pallas).
            pl.BlockSpec((1, B, patch_feat), lambda p: (p, 0, 0)),      # patches
            pl.BlockSpec((1, _C_FEAT, _H1), lambda p: (p, 0, 0)),       # w1 tile (~1 MiB)
            # Small, grid-invariant operands stay whole-array in VMEM.
            _vmem_spec(),   # knn
            _vmem_spec(),   # wf
            _vmem_spec(),   # bf
            _vmem_spec(),   # b1
            _vmem_spec(),   # g1
            _vmem_spec(),   # be1
            _vmem_spec(),   # w2
            _vmem_spec(),   # b2
            _vmem_spec(),   # g2
            _vmem_spec(),   # be2
            _vmem_spec(),   # w3
            _vmem_spec(),   # b3
        ],
        out_specs=pl.BlockSpec((B, num_classes), lambda p: (0, 0)),
        scratch_shapes=[pltpu.VMEM((B, _H1), jnp.float32)],
        compiler_params=pltpu.CompilerParams(
            # Reduction over positions -> "arbitrary".
            dimension_semantics=("arbitrary",),
            # ~3 MiB true pipelined footprint; stays far under v7x's 64 MiB.
            vmem_limit_bytes=16 * 1024 * 1024,
        ),
    )(patches, params["w1"], knn2,
      params["wf"], params["bf"],
      params["b1"], params["g1"], params["be1"],
      params["w2"], params["b2"], params["g2"], params["be2"],
      params["w3"], params["b3"])


# ---------------------------------------------------------------------------
# Host-side (one-time) weight preparation: fold the NCHW crop + row-major
# reshape ordering into FC1's weight rows and lay it out position-major tiles.
#   PyTorch row order (W1 transposed to (9504, 256)): row = c*9 + (h*3 + w)
#   Kernel consumes position-major tiles:              (p, c) -> (9, 1056, 256)
# ---------------------------------------------------------------------------
def prepare_params(params):
    p = jnp.arange(_N_POS)
    c = jnp.arange(_C_FEAT)
    orig_rows = (c[None, :] * _N_POS + p[:, None]).reshape(-1)   # new (p, c) order
    prepared = dict(params)
    prepared["w1"] = params["w1"][orig_rows, :].reshape(_N_POS, _C_FEAT, _H1)
    return prepared


# ---------------------------------------------------------------------------
# Pure-JAX reference: original path (full 49-patch backbone stand-in, NCHW
# feature map, crop, row-major reshape, un-permuted w1). Used for validation.
# ---------------------------------------------------------------------------
def reference_forward(input_images, input_knn, params):
    B, C, H, W = input_images.shape
    ph, pw = H // 7, W // 7
    patches = input_images.reshape(B, C, 7, ph, 7, pw)
    patches = patches.transpose(0, 2, 4, 1, 3, 5).reshape(B * 49, C * ph * pw)
    emb = patches @ params["wf"] + params["bf"]
    feat = emb.reshape(B, 7, 7, _C_FEAT).transpose(0, 3, 1, 2)   # NCHW
    feat = feat[:, :, 2:5, 2:5]
    x = feat.reshape(-1, _N_POS * _C_FEAT)

    h1 = x @ params["w1"] + params["b1"]
    mu1 = h1.mean(0, keepdims=True)
    var1 = ((h1 - mu1) ** 2).mean(0, keepdims=True)
    h1 = (h1 - mu1) * jax.lax.rsqrt(var1 + _BN_EPS) * params["g1"] + params["be1"]
    h1 = jnp.where(h1 > 0, h1, _NEG_SLOPE * h1)

    h2 = h1 @ params["w2"] + params["b2"]
    mu2 = h2.mean(0, keepdims=True)
    var2 = ((h2 - mu2) ** 2).mean(0, keepdims=True)
    h2 = (h2 - mu2) * jax.lax.rsqrt(var2 + _BN_EPS) * params["g2"] + params["be2"]
    h2 = jnp.where(h2 > 0, h2, _NEG_SLOPE * h2)

    knn2 = input_knn.reshape(-1, 1).astype(jnp.float32)
    logits = jnp.concatenate([h2, knn2], axis=1) @ params["w3"] + params["b3"]
    return jax.nn.softmax(logits, axis=1)


def init_params(key, num_classes=8):
    ks = jax.random.split(key, 8)
    s = 0.02
    return {
        # backbone stand-in: 4x4x3 patch -> 1056 channels
        "wf": jax.random.normal(ks[0], (48, _C_FEAT), jnp.float32) * s,
        "bf": jnp.zeros((1, _C_FEAT), jnp.float32),
        # FC1: 9504 -> 256 (stored transposed, PyTorch (c,h,w) row order)
        "w1": jax.random.normal(ks[1], (_N_POS * _C_FEAT, _H1), jnp.float32) * s,
        "b1": jax.random.normal(ks[2], (1, _H1), jnp.float32) * s,
        "g1": jnp.ones((1, _H1), jnp.float32),
        "be1": jnp.zeros((1, _H1), jnp.float32),
        # FC2: 256 -> 9
        "w2": jax.random.normal(ks[3], (_H1, _H2), jnp.float32) * s,
        "b2": jax.random.normal(ks[4], (1, _H2), jnp.float32) * s,
        "g2": jnp.ones((1, _H2), jnp.float32),
        "be2": jnp.zeros((1, _H2), jnp.float32),
        # FC3: 10 -> num_classes (use_nn_feature == 1)
        "w3": jax.random.normal(ks[5], (_H2 + 1, num_classes), jnp.float32) * s,
        "b3": jax.random.normal(ks[6], (1, num_classes), jnp.float32) * s,
    }


if __name__ == "__main__":
    key = jax.random.PRNGKey(0)
    k_img, k_knn, k_par = jax.random.split(key, 3)

    B, num_classes = 2, 8
    input_images = jax.random.normal(k_img, (B, 3, 28, 28), jnp.float32)  # NCHW
    input_knn = jax.random.normal(k_knn, (B,), jnp.float32)

    params = init_params(k_par, num_classes=num_classes)
    prepared = prepare_params(params)   # one-time FC1 row permutation + tiling

    out = jax.jit(nasnet_wrapper_forward)(input_images, input_knn, prepared)
    out = jax.block_until_ready(out)

    ref = jax.jit(reference_forward)(input_images, input_knn, params)
    ref = jax.block_until_ready(ref)

    assert out.shape == (B, num_classes)
    row_sums = jnp.sum(out, axis=1)
    assert bool(jnp.all(jnp.abs(row_sums - 1.0) < 1e-4))
    assert bool(jnp.max(jnp.abs(out - ref)) < 1e-3)
    print("KERNEL_OK")
</pallas_src>

<mosaic_0001>
module attributes {stable_mosaic.version = 11 : i64} {
  func.func @_fused_kernel(%arg0: i32, %arg1: memref<1x2x48xf32, #tpu.memory_space<vmem>>, %arg2: memref<1x1056x256xf32, #tpu.memory_space<vmem>>, %arg3: memref<2x1xf32, #tpu.memory_space<vmem>>, %arg4: memref<48x1056xf32, #tpu.memory_space<vmem>>, %arg5: memref<1x1056xf32, #tpu.memory_space<vmem>>, %arg6: memref<1x256xf32, #tpu.memory_space<vmem>>, %arg7: memref<1x256xf32, #tpu.memory_space<vmem>>, %arg8: memref<1x256xf32, #tpu.memory_space<vmem>>, %arg9: memref<256x9xf32, #tpu.memory_space<vmem>>, %arg10: memref<1x9xf32, #tpu.memory_space<vmem>>, %arg11: memref<1x9xf32, #tpu.memory_space<vmem>>, %arg12: memref<1x9xf32, #tpu.memory_space<vmem>>, %arg13: memref<10x8xf32, #tpu.memory_space<vmem>>, %arg14: memref<1x8xf32, #tpu.memory_space<vmem>>, %arg15: memref<2x8xf32, #tpu.memory_space<vmem>>, %arg16: memref<2x256xf32, #tpu.memory_space<vmem>>) attributes {dimension_semantics = [#tpu.dimension_semantics<arbitrary>], iteration_bounds = array<i64: 9>, scalar_prefetch = 0 : i64, scratch_operands = 1 : i64, tpu.core_type = #tpu.core_type<tc>, window_params = [{transform_indices = @transform_0, window_bounds = array<i64: 1, 2, 48>}, {transform_indices = @transform_1, window_bounds = array<i64: 1, 1056, 256>}, {pipeline_mode = #tpu.pipeline_mode<synchronous>, transform_indices = @transform_2, window_bounds = array<i64: 2, 1>}, {pipeline_mode = #tpu.pipeline_mode<synchronous>, transform_indices = @transform_3, window_bounds = array<i64: 48, 1056>}, {pipeline_mode = #tpu.pipeline_mode<synchronous>, transform_indices = @transform_4, window_bounds = array<i64: 1, 1056>}, {pipeline_mode = #tpu.pipeline_mode<synchronous>, transform_indices = @transform_5, window_bounds = array<i64: 1, 256>}, {pipeline_mode = #tpu.pipeline_mode<synchronous>, transform_indices = @transform_6, window_bounds = array<i64: 1, 256>}, {pipeline_mode = #tpu.pipeline_mode<synchronous>, transform_indices = @transform_7, window_bounds = array<i64: 1, 256>}, {pipeline_mode = #tpu.pipeline_mode<synchronous>, transform_indices = @transform_8, window_bounds = array<i64: 256, 9>}, {pipeline_mode = #tpu.pipeline_mode<synchronous>, transform_indices = @transform_9, window_bounds = array<i64: 1, 9>}, {pipeline_mode = #tpu.pipeline_mode<synchronous>, transform_indices = @transform_10, window_bounds = array<i64: 1, 9>}, {pipeline_mode = #tpu.pipeline_mode<synchronous>, transform_indices = @transform_11, window_bounds = array<i64: 1, 9>}, {pipeline_mode = #tpu.pipeline_mode<synchronous>, transform_indices = @transform_12, window_bounds = array<i64: 10, 8>}, {pipeline_mode = #tpu.pipeline_mode<synchronous>, transform_indices = @transform_13, window_bounds = array<i64: 1, 8>}, {pipeline_mode = #tpu.pipeline_mode<synchronous>, transform_indices = @transform_14, window_bounds = array<i64: 2, 8>}]} {
    %c0_i32 = arith.constant 0 : i32
    %0 = arith.cmpi eq, %arg0, %c0_i32 : i32
    %1 = arith.extui %0 : i1 to i32
    %c0_i32_0 = arith.constant 0 : i32
    %2 = arith.cmpi ne, %1, %c0_i32_0 : i32
    scf.if %2 {
      %cst_16 = arith.constant 0.000000e+00 : f32
      %19 = vector.broadcast %cst_16 : f32 to vector<2x256xf32>
      %c0_17 = arith.constant 0 : index
      %c0_18 = arith.constant 0 : index
      %20 = vector.load %arg16[%c0_17, %c0_18] : memref<2x256xf32, #tpu.memory_space<vmem>>, vector<2x256xf32>
      tpu.vector_store %arg16[%c0_17, %c0_18], %19 {strides = array<i32>} : memref<2x256xf32, #tpu.memory_space<vmem>>, vector<2x256xf32>,
    } else {
    }
    %c0 = arith.constant 0 : index
    %c0_1 = arith.constant 0 : index
    %c0_2 = arith.constant 0 : index
    %3 = vector.load %arg1[%c0, %c0_1, %c0_2] : memref<1x2x48xf32, #tpu.memory_space<vmem>>, vector<1x2x48xf32>
    %4 = vector.shape_cast %3 : vector<1x2x48xf32> to vector<2x48xf32>
    %c0_3 = arith.constant 0 : index
    %c0_4 = arith.constant 0 : index
    %5 = vector.load %arg4[%c0_3, %c0_4] : memref<48x1056xf32, #tpu.memory_space<vmem>>, vector<48x1056xf32>
    %cst = arith.constant dense<0.000000e+00> : vector<2x1056xf32>
    %6 = tpu.matmul %4, %5, %cst {dimension_numbers = #tpu.dot_dimension_numbers<[1], [0], [0], [1], [0, 0, 1, 1], [], []>} : vector<2x48xf32>, vector<48x1056xf32>, vector<2x1056xf32> -> vector<2x1056xf32>
    %c0_5 = arith.constant 0 : index
    %c0_6 = arith.constant 0 : index
    %7 = vector.load %arg5[%c0_5, %c0_6] : memref<1x1056xf32, #tpu.memory_space<vmem>>, vector<1x1056xf32>
    %8 = vector.broadcast %7 : vector<1x1056xf32> to vector<2x1056xf32>
    %9 = arith.addf %6, %8 : vector<2x1056xf32>
    %c0_7 = arith.constant 0 : index
    %c0_8 = arith.constant 0 : index
    %10 = vector.load %arg16[%c0_7, %c0_8] : memref<2x256xf32, #tpu.memory_space<vmem>>, vector<2x256xf32>
    %c0_9 = arith.constant 0 : index
    %c0_10 = arith.constant 0 : index
    %c0_11 = arith.constant 0 : index
    %11 = vector.load %arg2[%c0_9, %c0_10, %c0_11] : memref<1x1056x256xf32, #tpu.memory_space<vmem>>, vector<1x1056x256xf32>
    %12 = vector.shape_cast %11 : vector<1x1056x256xf32> to vector<1056x256xf32>
    %cst_12 = arith.constant dense<0.000000e+00> : vector<2x256xf32>
    %13 = tpu.matmul %9, %12, %cst_12 {dimension_numbers = #tpu.dot_dimension_numbers<[1], [0], [0], [1], [0, 0, 1, 1], [], []>} : vector<2x1056xf32>, vector<1056x256xf32>, vector<2x256xf32> -> vector<2x256xf32>
    %14 = arith.addf %10, %13 : vector<2x256xf32>
    %c0_13 = arith.constant 0 : index
    %c0_14 = arith.constant 0 : index
    %15 = vector.load %arg16[%c0_13, %c0_14] : memref<2x256xf32, #tpu.memory_space<vmem>>, vector<2x256xf32>
    tpu.vector_store %arg16[%c0_13, %c0_14], %14 {strides = array<i32>} : memref<2x256xf32, #tpu.memory_space<vmem>>, vector<2x256xf32>,
    %c8_i32 = arith.constant 8 : i32
    %16 = arith.cmpi eq, %arg0, %c8_i32 : i32
    %17 = arith.extui %16 : i1 to i32
    %c0_i32_15 = arith.constant 0 : i32
    %18 = arith.cmpi ne, %17, %c0_i32_15 : i32
    scf.if %18 {
      %c0_16 = arith.constant 0 : index
      %c0_17 = arith.constant 0 : index
      %19 = vector.load %arg16[%c0_16, %c0_17] : memref<2x256xf32, #tpu.memory_space<vmem>>, vector<2x256xf32>
      %c0_18 = arith.constant 0 : index
      %c0_19 = arith.constant 0 : index
      %20 = vector.load %arg6[%c0_18, %c0_19] : memref<1x256xf32, #tpu.memory_space<vmem>>, vector<1x256xf32>
      %21 = vector.broadcast %20 : vector<1x256xf32> to vector<2x256xf32>
      %22 = arith.addf %19, %21 : vector<2x256xf32>
      %cst_20 = arith.constant dense<0.000000e+00> : vector<256xf32>
      %23 = vector.multi_reduction <add>, %22, %cst_20 [0] : vector<2x256xf32> to vector<256xf32>
      %24 = vector.shape_cast %23 : vector<256xf32> to vector<1x256xf32>
      %cst_21 = arith.constant 2.000000e+00 : f32
      %25 = vector.broadcast %cst_21 : f32 to vector<1x256xf32>
      %26 = arith.divf %24, %25 : vector<1x256xf32>
      %27 = vector.broadcast %26 : vector<1x256xf32> to vector<2x256xf32>
      %28 = arith.subf %22, %27 : vector<2x256xf32>
      %29 = arith.mulf %28, %28 : vector<2x256xf32>
      %cst_22 = arith.constant dense<0.000000e+00> : vector<256xf32>
      %30 = vector.multi_reduction <add>, %29, %cst_22 [0] : vector<2x256xf32> to vector<256xf32>
      %31 = vector.shape_cast %30 : vector<256xf32> to vector<1x256xf32>
      %cst_23 = arith.constant 2.000000e+00 : f32
      %32 = vector.broadcast %cst_23 : f32 to vector<1x256xf32>
      %33 = arith.divf %31, %32 : vector<1x256xf32>
      %34 = vector.broadcast %26 : vector<1x256xf32> to vector<2x256xf32>
      %35 = arith.subf %22, %34 : vector<2x256xf32>
      %cst_24 = arith.constant 9.99999974E-6 : f32
      %36 = vector.broadcast %cst_24 : f32 to vector<1x256xf32>
      %37 = arith.addf %33, %36 : vector<1x256xf32>
      %38 = math.rsqrt %37 : vector<1x256xf32>
      %39 = vector.broadcast %38 : vector<1x256xf32> to vector<2x256xf32>
      %40 = arith.mulf %35, %39 : vector<2x256xf32>
      %c0_25 = arith.constant 0 : index
      %c0_26 = arith.constant 0 : index
      %41 = vector.load %arg7[%c0_25, %c0_26] : memref<1x256xf32, #tpu.memory_space<vmem>>, vector<1x256xf32>
      %42 = vector.broadcast %41 : vector<1x256xf32> to vector<2x256xf32>
      %43 = arith.mulf %40, %42 : vector<2x256xf32>
      %c0_27 = arith.constant 0 : index
      %c0_28 = arith.constant 0 : index
      %44 = vector.load %arg8[%c0_27, %c0_28] : memref<1x256xf32, #tpu.memory_space<vmem>>, vector<1x256xf32>
      %45 = vector.broadcast %44 : vector<1x256xf32> to vector<2x256xf32>
      %46 = arith.addf %43, %45 : vector<2x256xf32>
      %cst_29 = arith.constant 0.000000e+00 : f32
      %47 = vector.broadcast %cst_29 : f32 to vector<2x256xf32>
      %48 = arith.cmpf ogt, %46, %47 : vector<2x256xf32>
      %cst_30 = arith.constant 2.000000e-01 : f32
      %49 = vector.broadcast %cst_30 : f32 to vector<2x256xf32>
      %50 = arith.mulf %49, %46 : vector<2x256xf32>
      %51 = arith.select %48, %46, %50 : vector<2x256xi1>, vector<2x256xf32>
      %c0_31 = arith.constant 0 : index
      %c0_32 = arith.constant 0 : index
      %52 = vector.load %arg9[%c0_31, %c0_32] : memref<256x9xf32, #tpu.memory_space<vmem>>, vector<256x9xf32>
      %cst_33 = arith.constant dense<0.000000e+00> : vector<2x9xf32>
      %53 = tpu.matmul %51, %52, %cst_33 {dimension_numbers = #tpu.dot_dimension_numbers<[1], [0], [0], [1], [0, 0, 1, 1], [], []>} : vector<2x256xf32>, vector<256x9xf32>, vector<2x9xf32> -> vector<2x9xf32>
      %c0_34 = arith.constant 0 : index
      %c0_35 = arith.constant 0 : index
      %54 = vector.load %arg10[%c0_34, %c0_35] : memref<1x9xf32, #tpu.memory_space<vmem>>, vector<1x9xf32>
      %55 = vector.broadcast %54 : vector<1x9xf32> to vector<2x9xf32>
      %56 = arith.addf %53, %55 : vector<2x9xf32>
      %cst_36 = arith.constant dense<0.000000e+00> : vector<9xf32>
      %57 = vector.multi_reduction <add>, %56, %cst_36 [0] : vector<2x9xf32> to vector<9xf32>
      %58 = vector.shape_cast %57 : vector<9xf32> to vector<1x9xf32>
      %cst_37 = arith.constant 2.000000e+00 : f32
      %59 = vector.broadcast %cst_37 : f32 to vector<1x9xf32>
      %60 = arith.divf %58, %59 : vector<1x9xf32>
      %61 = vector.broadcast %60 : vector<1x9xf32> to vector<2x9xf32>
      %62 = arith.subf %56, %61 : vector<2x9xf32>
      %63 = arith.mulf %62, %62 : vector<2x9xf32>
      %cst_38 = arith.constant dense<0.000000e+00> : vector<9xf32>
      %64 = vector.multi_reduction <add>, %63, %cst_38 [0] : vector<2x9xf32> to vector<9xf32>
      %65 = vector.shape_cast %64 : vector<9xf32> to vector<1x9xf32>
      %cst_39 = arith.constant 2.000000e+00 : f32
      %66 = vector.broadcast %cst_39 : f32 to vector<1x9xf32>
      %67 = arith.divf %65, %66 : vector<1x9xf32>
      %68 = vector.broadcast %60 : vector<1x9xf32> to vector<2x9xf32>
      %69 = arith.subf %56, %68 : vector<2x9xf32>
      %cst_40 = arith.constant 9.99999974E-6 : f32
      %70 = vector.broadcast %cst_40 : f32 to vector<1x9xf32>
      %71 = arith.addf %67, %70 : vector<1x9xf32>
      %72 = math.rsqrt %71 : vector<1x9xf32>
      %73 = vector.broadcast %72 : vector<1x9xf32> to vector<2x9xf32>
      %74 = arith.mulf %69, %73 : vector<2x9xf32>
      %c0_41 = arith.constant 0 : index
      %c0_42 = arith.constant 0 : index
      %75 = vector.load %arg11[%c0_41, %c0_42] : memref<1x9xf32, #tpu.memory_space<vmem>>, vector<1x9xf32>
      %76 = vector.broadcast %75 : vector<1x9xf32> to vector<2x9xf32>
      %77 = arith.mulf %74, %76 : vector<2x9xf32>
      %c0_43 = arith.constant 0 : index
      %c0_44 = arith.constant 0 : index
      %78 = vector.load %arg12[%c0_43, %c0_44] : memref<1x9xf32, #tpu.memory_space<vmem>>, vector<1x9xf32>
      %79 = vector.broadcast %78 : vector<1x9xf32> to vector<2x9xf32>
      %80 = arith.addf %77, %79 : vector<2x9xf32>
      %cst_45 = arith.constant 0.000000e+00 : f32
      %81 = vector.broadcast %cst_45 : f32 to vector<2x9xf32>
      %82 = arith.cmpf ogt, %80, %81 : vector<2x9xf32>
      %cst_46 = arith.constant 2.000000e-01 : f32
      %83 = vector.broadcast %cst_46 : f32 to vector<2x9xf32>
      %84 = arith.mulf %83, %80 : vector<2x9xf32>
      %85 = arith.select %82, %80, %84 : vector<2x9xi1>, vector<2x9xf32>
      %c0_47 = arith.constant 0 : index
      %c0_48 = arith.constant 0 : index
      %86 = vector.load %arg13[%c0_47, %c0_48] : memref<10x8xf32, #tpu.memory_space<vmem>>, vector<10x8xf32>
      %87 = vector.extract_strided_slice %86 {offsets = [0, 0], sizes = [9, 8], strides = [1, 1]} : vector<10x8xf32> to vector<9x8xf32>
      %cst_49 = arith.constant dense<0.000000e+00> : vector<2x8xf32>
      %88 = tpu.matmul %85, %87, %cst_49 {dimension_numbers = #tpu.dot_dimension_numbers<[1], [0], [0], [1], [0, 0, 1, 1], [], []>} : vector<2x9xf32>, vector<9x8xf32>, vector<2x8xf32> -> vector<2x8xf32>
      %c0_50 = arith.constant 0 : index
      %c0_51 = arith.constant 0 : index
      %89 = vector.load %arg3[%c0_50, %c0_51] : memref<2x1xf32, #tpu.memory_space<vmem>>, vector<2x1xf32>
      %90 = vector.extract_strided_slice %86 {offsets = [9, 0], sizes = [1, 8], strides = [1, 1]} : vector<10x8xf32> to vector<1x8xf32>
      %91 = vector.broadcast %89 : vector<2x1xf32> to vector<2x8xf32>
      %92 = vector.broadcast %90 : vector<1x8xf32> to vector<2x8xf32>
      %93 = arith.mulf %91, %92 : vector<2x8xf32>
      %94 = arith.addf %88, %93 : vector<2x8xf32>
      %c0_52 = arith.constant 0 : index
      %c0_53 = arith.constant 0 : index
      %95 = vector.load %arg14[%c0_52, %c0_53] : memref<1x8xf32, #tpu.memory_space<vmem>>, vector<1x8xf32>
      %96 = vector.broadcast %95 : vector<1x8xf32> to vector<2x8xf32>
      %97 = arith.addf %94, %96 : vector<2x8xf32>
      %cst_54 = arith.constant dense<0xFF800000> : vector<2xf32>
      %98 = vector.multi_reduction <maximumf>, %97, %cst_54 [1] : vector<2x8xf32> to vector<2xf32>
      %99 = vector.shape_cast %98 : vector<2xf32> to vector<2x1xf32>
      %100 = vector.broadcast %99 : vector<2x1xf32> to vector<2x8xf32>
      %101 = arith.subf %97, %100 : vector<2x8xf32>
      %102 = math.exp %101 : vector<2x8xf32>
      %cst_55 = arith.constant dense<0.000000e+00> : vector<2xf32>
      %103 = vector.multi_reduction <add>, %102, %cst_55 [1] : vector<2x8xf32> to vector<2xf32>
      %104 = vector.shape_cast %103 : vector<2xf32> to vector<2x1xf32>
      %105 = vector.broadcast %104 : vector<2x1xf32> to vector<2x8xf32>
      %106 = arith.divf %102, %105 : vector<2x8xf32>
      %c0_56 = arith.constant 0 : index
      %c0_57 = arith.constant 0 : index
      %107 = vector.load %arg15[%c0_56, %c0_57] : memref<2x8xf32, #tpu.memory_space<vmem>>, vector<2x8xf32>
      tpu.vector_store %arg15[%c0_56, %c0_57], %106 {strides = array<i32>} : memref<2x8xf32, #tpu.memory_space<vmem>>, vector<2x8xf32>,
    } else {
    }
    return
  }
  func.func @transform_0(%arg0: i32) -> (i32, i32, i32) {
    %c0_i32 = arith.constant 0 : i32
    %c0_i32_0 = arith.constant 0 : i32
    %c0_i32_1 = arith.constant 0 : i32
    return %arg0, %c0_i32, %c0_i32_0 : i32, i32, i32
  }
  func.func @transform_1(%arg0: i32) -> (i32, i32, i32) {
    %c0_i32 = arith.constant 0 : i32
    %c0_i32_0 = arith.constant 0 : i32
    %c0_i32_1 = arith.constant 0 : i32
    return %arg0, %c0_i32, %c0_i32_0 : i32, i32, i32
  }
  func.func @transform_2(%arg0: i32) -> (i32, i32) {
    %c0_i32 = arith.constant 0 : i32
    %c0_i32_0 = arith.constant 0 : i32
    %c0_i32_1 = arith.constant 0 : i32
    return %c0_i32, %c0_i32_0 : i32, i32
  }
  func.func @transform_3(%arg0: i32) -> (i32, i32) {
    %c0_i32 = arith.constant 0 : i32
    %c0_i32_0 = arith.constant 0 : i32
    %c0_i32_1 = arith.constant 0 : i32
    return %c0_i32, %c0_i32_0 : i32, i32
  }
  func.func @transform_4(%arg0: i32) -> (i32, i32) {
    %c0_i32 = arith.constant 0 : i32
    %c0_i32_0 = arith.constant 0 : i32
    %c0_i32_1 = arith.constant 0 : i32
    return %c0_i32, %c0_i32_0 : i32, i32
  }
  func.func @transform_5(%arg0: i32) -> (i32, i32) {
    %c0_i32 = arith.constant 0 : i32
    %c0_i32_0 = arith.constant 0 : i32
    %c0_i32_1 = arith.constant 0 : i32
    return %c0_i32, %c0_i32_0 : i32, i32
  }
  func.func @transform_6(%arg0: i32) -> (i32, i32) {
    %c0_i32 = arith.constant 0 : i32
    %c0_i32_0 = arith.constant 0 : i32
    %c0_i32_1 = arith.constant 0 : i32
    return %c0_i32, %c0_i32_0 : i32, i32
  }
  func.func @transform_7(%arg0: i32) -> (i32, i32) {
    %c0_i32 = arith.constant 0 : i32
    %c0_i32_0 = arith.constant 0 : i32
    %c0_i32_1 = arith.constant 0 : i32
    return %c0_i32, %c0_i32_0 : i32, i32
  }
  func.func @transform_8(%arg0: i32) -> (i32, i32) {
    %c0_i32 = arith.constant 0 : i32
    %c0_i32_0 = arith.constant 0 : i32
    %c0_i32_1 = arith.constant 0 : i32
    return %c0_i32, %c0_i32_0 : i32, i32
  }
  func.func @transform_9(%arg0: i32) -> (i32, i32) {
    %c0_i32 = arith.constant 0 : i32
    %c0_i32_0 = arith.constant 0 : i32
    %c0_i32_1 = arith.constant 0 : i32
    return %c0_i32, %c0_i32_0 : i32, i32
  }
  func.func @transform_10(%arg0: i32) -> (i32, i32) {
    %c0_i32 = arith.constant 0 : i32
    %c0_i32_0 = arith.constant 0 : i32
    %c0_i32_1 = arith.constant 0 : i32
    return %c0_i32, %c0_i32_0 : i32, i32
  }
  func.func @transform_11(%arg0: i32) -> (i32, i32) {
    %c0_i32 = arith.constant 0 : i32
    %c0_i32_0 = arith.constant 0 : i32
    %c0_i32_1 = arith.constant 0 : i32
    return %c0_i32, %c0_i32_0 : i32, i32
  }
  func.func @transform_12(%arg0: i32) -> (i32, i32) {
    %c0_i32 = arith.constant 0 : i32
    %c0_i32_0 = arith.constant 0 : i32
    %c0_i32_1 = arith.constant 0 : i32
    return %c0_i32, %c0_i32_0 : i32, i32
  }
  func.func @transform_13(%arg0: i32) -> (i32, i32) {
    %c0_i32 = arith.constant 0 : i32
    %c0_i32_0 = arith.constant 0 : i32
    %c0_i32_1 = arith.constant 0 : i32
    return %c0_i32, %c0_i32_0 : i32, i32
  }
  func.func @transform_14(%arg0: i32) -> (i32, i32) {
    %c0_i32 = arith.constant 0 : i32
    %c0_i32_0 = arith.constant 0 : i32
    %c0_i32_1 = arith.constant 0 : i32
    return %c0_i32, %c0_i32_0 : i32, i32
  }
}

</mosaic_0001>

<llo_original>
// kernel: nasnet_wrapper_forward.1
$region0: #{nasnet_wrapper_forward.1}
  #allocation0 [shape = 'u32[]', space=smem, size = 0x4, offset = 0x4, fixed_abs, tag = 'smem constant byte address 0x4 - core index']
  #allocation1 [shape = 'u32[144,128]{1,0:T(1,128)}', space=vmem, size = 0x12000, scoped, tag = 'internal scratch']
  #allocation2 [shape = 'f32[2,256]{1,0:T(2,128)}', space=vmem, size = 0x800, scoped, tag = 'scratch operand']
  %s0 = inlined_call_operand.vmem [shape: f32[9,2,48], index: 0, kind: input, shape index: {}]
  %s1 = inlined_call_operand.hbm [shape: f32[9,1056,256], index: 1, kind: input, shape index: {}]
  %s2 = inlined_call_operand.vmem [shape: f32[2,1], index: 2, kind: input, shape index: {}]
  %s3 = inlined_call_operand.hbm [shape: f32[48,1056], index: 3, kind: input, shape index: {}]
  %s4 = inlined_call_operand.hbm [shape: f32[1,1056], index: 4, kind: input, shape index: {}]
  %s5 = inlined_call_operand.hbm [shape: f32[1,256], index: 5, kind: input, shape index: {}]
  %s6 = inlined_call_operand.hbm [shape: f32[1,256], index: 6, kind: input, shape index: {}]
  %s7 = inlined_call_operand.hbm [shape: f32[1,256], index: 7, kind: input, shape index: {}]
  %s8 = inlined_call_operand.vmem [shape: f32[256,9], index: 8, kind: input, shape index: {}]
  %s9 = inlined_call_operand.hbm [shape: f32[1,9], index: 9, kind: input, shape index: {}]
  %s10 = inlined_call_operand.hbm [shape: f32[1,9], index: 10, kind: input, shape index: {}]
  %s11 = inlined_call_operand.hbm [shape: f32[1,9], index: 11, kind: input, shape index: {}]
  %s12 = inlined_call_operand.vmem [shape: f32[10,8], index: 12, kind: input, shape index: {}]
  %s13 = inlined_call_operand.hbm [shape: f32[1,8], index: 13, kind: input, shape index: {}]
  %s14 = inlined_call_operand.hbm [shape: f32[2,8], index: 14, kind: output, shape index: {}]
  %s15 = sld [smem:[#allocation0]]
  $region137: #{nasnet_wrapper_forward.1} parent=0
    _
  %s17 = ssub.s32 1, %s15
  %s18 = scalar_select 0, %s17, %s15
  $region1: #{nasnet_wrapper_forward.1} parent=0
    #allocation3 [shape = 'u8[2162688]{0}', space=vmem, size = 0x210000, scoped, tag = 'input window, operand 1']
    #allocation4 [shape = 's32[2]{0}', space=sflag, size = 0x8, scoped, tag = 'scoped memory for nasnet_wrapper_forward.1']
    #allocation5 [shape = 's32[2]{0}', space=sflag, size = 0x8, scoped, tag = 'scoped memory for nasnet_wrapper_forward.1']
    #allocation6 [shape = 'u8[221184]{0}', space=vmem, size = 0x36000, scoped, tag = 'input window, operand 3, single buffered']
    #allocation7 [shape = 's32[1]{0}', space=sflag, size = 0x4, scoped, tag = 'scoped memory for nasnet_wrapper_forward.1']
    #allocation8 [shape = 'u8[4608]{0}', space=vmem, size = 0x1400, scoped, tag = 'input window, operand 4, single buffered']
    #allocation9 [shape = 'u8[1024]{0}', space=vmem, size = 0x400, scoped, tag = 'input window, operand 5, single buffered']
    #allocation10 [shape = 's32[1]{0}', space=sflag, size = 0x4, scoped, tag = 'scoped memory for nasnet_wrapper_forward.1']
    #allocation11 [shape = 'u8[1024]{0}', space=vmem, size = 0x400, scoped, tag = 'input window, operand 6, single buffered']
    #allocation12 [shape = 'u8[1024]{0}', space=vmem, size = 0x400, scoped, tag = 'input window, operand 7, single buffered']
    #allocation13 [shape = 's32[1]{0}', space=sflag, size = 0x4, scoped, tag = 'scoped memory for nasnet_wrapper_forward.1']
    #allocation14 [shape = 'u8[512]{0}', space=vmem, size = 0x400, scoped, tag = 'input window, operand 9, single buffered']
    #allocation15 [shape = 'u8[512]{0}', space=vmem, size = 0x400, scoped, tag = 'input window, operand 10, single buffered']
    #allocation16 [shape = 's32[1]{0}', space=sflag, size = 0x4, scoped, tag = 'scoped memory for nasnet_wrapper_forward.1']
    #allocation17 [shape = 'u8[512]{0}', space=vmem, size = 0x400, scoped, tag = 'input window, operand 11, single buffered']
    #allocation18 [shape = 'u8[512]{0}', space=vmem, size = 0x400, scoped, tag = 'input window, operand 13, single buffered']
    #allocation19 [shape = 's32[1]{0}', space=sflag, size = 0x4, scoped, tag = 'scoped memory for nasnet_wrapper_forward.1']
    #allocation20 [shape = 'u8[1024]{0}', space=vmem, size = 0x400, scoped, tag = 'output window, operand 0, single buffered']
    %19 = vsyncpa [#allocation4], 0
    %s20 = scalar_lea.sflag [#allocation4], 1
    %21 = vsyncpa %s20, 0
    %22 = vsyncpa [#allocation7], 0
    %23 = vsyncpa [#allocation10], 0
    %24 = vsyncpa [#allocation13], 0
    %25 = vsyncpa [#allocation16], 0
    %26 = vsyncpa [#allocation19], 0
    %27 = vsyncpa [#allocation5], 0
    loop: start=0, step=1, limit=11
    $region2: #{nasnet_wrapper_forward.1} parent=1 // loop_pre_header
      _
    $region3: #{nasnet_wrapper_forward.1} parent=1 // loop_header
      %s29 = sphi 0, %s33
      %p30 = scmp.ge.s32.totalorder %s29, 11
      %s39 = sphi 0, %s41
      %s42 = sphi 0, %s39
      %s43 = sphi 0, %s42
      %s59 = sphi 0, %s43
      %s65 = sphi 0, %s67
      %s68 = sphi 0, %s65
      %s69 = sphi 0, %s68
      %s85 = sphi 0, %s69
      %s89 = sphi 0, %s89
      %s91 = sphi 0, %s89
      %s92 = sphi 0, %s91
      %s106 = sphi 0, %s92
      %s110 = sphi 0, %s110
      %s112 = sphi 0, %s110
      %s113 = sphi 0, %s112
      %s127 = sphi 0, %s113
      %s131 = sphi 0, %s131
      %s133 = sphi 0, %s131
      %s134 = sphi 0, %s133
      %s148 = sphi 0, %s134
      %s152 = sphi 0, %s152
      %s154 = sphi 0, %s152
      %s155 = sphi 0, %s154
      %s169 = sphi 0, %s155
      %s173 = sphi 0, %s173
      %s175 = sphi 0, %s173
      %s176 = sphi 0, %s175
      %s190 = sphi 0, %s176
      %s194 = sphi 0, %s194
      %s196 = sphi 0, %s194
      %s197 = sphi 0, %s196
      %s211 = sphi 0, %s197
      %s215 = sphi 0, %s215
      %s217 = sphi 0, %s215
      %s218 = sphi 0, %s217
      %s232 = sphi 0, %s218
      %s236 = sphi 0, %s236
      %s238 = sphi 0, %s236
      %s239 = sphi 0, %s238
      %s253 = sphi 0, %s239
      %s257 = sphi 0, %s257
      %s259 = sphi 0, %s257
      %s260 = sphi 0, %s259
      %s274 = sphi 0, %s260
      %s278 = sphi 0, %s278
      %s280 = sphi 0, %s278
      %s281 = sphi 0, %s280
      %s295 = sphi 0, %s281
      %s299 = sphi 0, %s299
      %s301 = sphi 0, %s299
      %s302 = sphi 0, %s301
      %s316 = sphi 0, %s302
      %s320 = sphi 0, %s320
      %s322 = sphi 0, %s320
      %s323 = sphi 0, %s322
      %s337 = sphi 0, %s323
      %s341 = sphi 0, %s341
      %s343 = sphi 0, %s341
      %s344 = sphi 0, %s343
      %s358 = sphi 0, %s344
    $region4: #{nasnet_wrapper_forward.1} parent=1 // loop_header_branch
      %32 = sbr.rel (%p30) target = $region8
    $region5: #{nasnet_wrapper_forward.1} parent=1 // loop_body
      %s34 = ssub.s32 %s29, 1
      %s35 = ssub.s32 %s29, 2
      %s36 = sadd.s32 %s29, 1
      %s37 = ssub.s32 %s29, %s36
      %p38 = scmp.eq.s32.totalorder %s37, 0
      %s40 = sadd.s32 %s39, 1
      %s41 = scalar_select %p38, %s39, %s40
      %p44 = pneg %p38
      %p45 = scmp.eq.s32.totalorder %s29, 8
      %p46 = por %p44, %p45
      %p47 = scmp.ne.s32.totalorder %s39, %s42
      %p48 = scmp.eq.s32.totalorder %s29, 0
      %p49 = por %p47, %p48
      %p50 = scmp.ne.s32.totalorder %s39, %s42
      %p51 = scmp.eq.s32.totalorder %s34, 8
      %p52 = por %p50, %p51
      %p53 = scmp.ne.s32.totalorder %s42, %s43
      %p54 = scmp.eq.s32.totalorder %s34, 0
      %p55 = por %p53, %p54
      %p56 = scmp.ne.s32.totalorder %s42, %s43
      %p57 = scmp.eq.s32.totalorder %s35, 8
      %p58 = por %p56, %p57
      %p60 = scmp.ne.s32.totalorder %s43, %s59
      %p61 = scmp.eq.s32.totalorder %s35, 0
      %p62 = por %p60, %p61
      %s63 = ssub.s32 %s29, %s36
      %p64 = scmp.eq.s32.totalorder %s63, 0
      %s66 = sadd.s32 %s65, 1
      %s67 = scalar_select %p64, %s65, %s66
      %p70 = pneg %p64
      %p71 = scmp.eq.s32.totalorder %s29, 8
      %p72 = por %p70, %p71
      %p73 = scmp.ne.s32.totalorder %s65, %s68
      %p74 = scmp.eq.s32.totalorder %s29, 0
      %p75 = por %p73, %p74
      %p76 = scmp.ne.s32.totalorder %s65, %s68
      %p77 = scmp.eq.s32.totalorder %s34, 8
      %p78 = por %p76, %p77
      %p79 = scmp.ne.s32.totalorder %s68, %s69
      %p80 = scmp.eq.s32.totalorder %s34, 0
      %p81 = por %p79, %p80
      %p82 = scmp.ne.s32.totalorder %s68, %s69
      %p83 = scmp.eq.s32.totalorder %s35, 8
      %p84 = por %p82, %p83
      %p86 = scmp.ne.s32.totalorder %s69, %s85
      %p87 = scmp.eq.s32.totalorder %s35, 0
      %p88 = por %p86, %p87
      %s90 = sadd.s32 %s89, 1
      %p93 = scmp.eq.s32.totalorder %s29, 8
      %p94 = scmp.ne.s32.totalorder %s89, %s91
      %p95 = scmp.eq.s32.totalorder %s29, 0
      %p96 = por %p94, %p95
      %p97 = scmp.ne.s32.totalorder %s89, %s91
      %p98 = scmp.eq.s32.totalorder %s34, 8
      %p99 = por %p97, %p98
      %p100 = scmp.ne.s32.totalorder %s91, %s92
      %p101 = scmp.eq.s32.totalorder %s34, 0
      %p102 = por %p100, %p101
      %p103 = scmp.ne.s32.totalorder %s91, %s92
      %p104 = scmp.eq.s32.totalorder %s35, 8
      %p105 = por %p103, %p104
      %p107 = scmp.ne.s32.totalorder %s92, %s106
      %p108 = scmp.eq.s32.totalorder %s35, 0
      %p109 = por %p107, %p108
      %s111 = sadd.s32 %s110, 1
      %p114 = scmp.eq.s32.totalorder %s29, 8
      %p115 = scmp.ne.s32.totalorder %s110, %s112
      %p116 = scmp.eq.s32.totalorder %s29, 0
      %p117 = por %p115, %p116
      %p118 = scmp.ne.s32.totalorder %s110, %s112
      %p119 = scmp.eq.s32.totalorder %s34, 8
      %p120 = por %p118, %p119
      %p121 = scmp.ne.s32.totalorder %s112, %s113
      %p122 = scmp.eq.s32.totalorder %s34, 0
      %p123 = por %p121, %p122
      %p124 = scmp.ne.s32.totalorder %s112, %s113
      %p125 = scmp.eq.s32.totalorder %s35, 8
      %p126 = por %p124, %p125
      %p128 = scmp.ne.s32.totalorder %s113, %s127
      %p129 = scmp.eq.s32.totalorder %s35, 0
      %p130 = por %p128, %p129
      %s132 = sadd.s32 %s131, 1
      %p135 = scmp.eq.s32.totalorder %s29, 8
      %p136 = scmp.ne.s32.totalorder %s131, %s133
      %p137 = scmp.eq.s32.totalorder %s29, 0
      %p138 = por %p136, %p137
      %p139 = scmp.ne.s32.totalorder %s131, %s133
      %p140 = scmp.eq.s32.totalorder %s34, 8
      %p141 = por %p139, %p140
      %p142 = scmp.ne.s32.totalorder %s133, %s134
      %p143 = scmp.eq.s32.totalorder %s34, 0
      %p144 = por %p142, %p143
      %p145 = scmp.ne.s32.totalorder %s133, %s134
      %p146 = scmp.eq.s32.totalorder %s35, 8
      %p147 = por %p145, %p146
      %p149 = scmp.ne.s32.totalorder %s134, %s148
      %p150 = scmp.eq.s32.totalorder %s35, 0
      %p151 = por %p149, %p150
      %s153 = sadd.s32 %s152, 1
      %p156 = scmp.eq.s32.totalorder %s29, 8
      %p157 = scmp.ne.s32.totalorder %s152, %s154
      %p158 = scmp.eq.s32.totalorder %s29, 0
      %p159 = por %p157, %p158
      %p160 = scmp.ne.s32.totalorder %s152, %s154
      %p161 = scmp.eq.s32.totalorder %s34, 8
      %p162 = por %p160, %p161
      %p163 = scmp.ne.s32.totalorder %s154, %s155
      %p164 = scmp.eq.s32.totalorder %s34, 0
      %p165 = por %p163, %p164
      %p166 = scmp.ne.s32.totalorder %s154, %s155
      %p167 = scmp.eq.s32.totalorder %s35, 8
      %p168 = por %p166, %p167
      %p170 = scmp.ne.s32.totalorder %s155, %s169
      %p171 = scmp.eq.s32.totalorder %s35, 0
      %p172 = por %p170, %p171
      %s174 = sadd.s32 %s173, 1
      %p177 = scmp.eq.s32.totalorder %s29, 8
      %p178 = scmp.ne.s32.totalorder %s173, %s175
      %p179 = scmp.eq.s32.totalorder %s29, 0
      %p180 = por %p178, %p179
      %p181 = scmp.ne.s32.totalorder %s173, %s175
      %p182 = scmp.eq.s32.totalorder %s34, 8
      %p183 = por %p181, %p182
      %p184 = scmp.ne.s32.totalorder %s175, %s176
      %p185 = scmp.eq.s32.totalorder %s34, 0
      %p186 = por %p184, %p185
      %p187 = scmp.ne.s32.totalorder %s175, %s176
      %p188 = scmp.eq.s32.totalorder %s35, 8
      %p189 = por %p187, %p188
      %p191 = scmp.ne.s32.totalorder %s176, %s190
      %p192 = scmp.eq.s32.totalorder %s35, 0
      %p193 = por %p191, %p192
      %s195 = sadd.s32 %s194, 1
      %p198 = scmp.eq.s32.totalorder %s29, 8
      %p199 = scmp.ne.s32.totalorder %s194, %s196
      %p200 = scmp.eq.s32.totalorder %s29, 0
      %p201 = por %p199, %p200
      %p202 = scmp.ne.s32.totalorder %s194, %s196
      %p203 = scmp.eq.s32.totalorder %s34, 8
      %p204 = por %p202, %p203
      %p205 = scmp.ne.s32.totalorder %s196, %s197
      %p206 = scmp.eq.s32.totalorder %s34, 0
      %p207 = por %p205, %p206
      %p208 = scmp.ne.s32.totalorder %s196, %s197
      %p209 = scmp.eq.s32.totalorder %s35, 8
      %p210 = por %p208, %p209
      %p212 = scmp.ne.s32.totalorder %s197, %s211
      %p213 = scmp.eq.s32.totalorder %s35, 0
      %p214 = por %p212, %p213
      %s216 = sadd.s32 %s215, 1
      %p219 = scmp.eq.s32.totalorder %s29, 8
      %p220 = scmp.ne.s32.totalorder %s215, %s217
      %p221 = scmp.eq.s32.totalorder %s29, 0
      %p222 = por %p220, %p221
      %p223 = scmp.ne.s32.totalorder %s215, %s217
      %p224 = scmp.eq.s32.totalorder %s34, 8
      %p225 = por %p223, %p224
      %p226 = scmp.ne.s32.totalorder %s217, %s218
      %p227 = scmp.eq.s32.totalorder %s34, 0
      %p228 = por %p226, %p227
      %p229 = scmp.ne.s32.totalorder %s217, %s218
      %p230 = scmp.eq.s32.totalorder %s35, 8
      %p231 = por %p229, %p230
      %p233 = scmp.ne.s32.totalorder %s218, %s232
      %p234 = scmp.eq.s32.totalorder %s35, 0
      %p235 = por %p233, %p234
      %s237 = sadd.s32 %s236, 1
      %p240 = scmp.eq.s32.totalorder %s29, 8
      %p241 = scmp.ne.s32.totalorder %s236, %s238
      %p242 = scmp.eq.s32.totalorder %s29, 0
      %p243 = por %p241, %p242
      %p244 = scmp.ne.s32.totalorder %s236, %s238
      %p245 = scmp.eq.s32.totalorder %s34, 8
      %p246 = por %p244, %p245
      %p247 = scmp.ne.s32.totalorder %s238, %s239
      %p248 = scmp.eq.s32.totalorder %s34, 0
      %p249 = por %p247, %p248
      %p250 = scmp.ne.s32.totalorder %s238, %s239
      %p251 = scmp.eq.s32.totalorder %s35, 8
      %p252 = por %p250, %p251
      %p254 = scmp.ne.s32.totalorder %s239, %s253
      %p255 = scmp.eq.s32.totalorder %s35, 0
      %p256 = por %p254, %p255
      %s258 = sadd.s32 %s257, 1
      %p261 = scmp.eq.s32.totalorder %s29, 8
      %p262 = scmp.ne.s32.totalorder %s257, %s259
      %p263 = scmp.eq.s32.totalorder %s29, 0
      %p264 = por %p262, %p263
      %p265 = scmp.ne.s32.totalorder %s257, %s259
      %p266 = scmp.eq.s32.totalorder %s34, 8
      %p267 = por %p265, %p266
      %p268 = scmp.ne.s32.totalorder %s259, %s260
      %p269 = scmp.eq.s32.totalorder %s34, 0
      %p270 = por %p268, %p269
      %p271 = scmp.ne.s32.totalorder %s259, %s260
      %p272 = scmp.eq.s32.totalorder %s35, 8
      %p273 = por %p271, %p272
      %p275 = scmp.ne.s32.totalorder %s260, %s274
      %p276 = scmp.eq.s32.totalorder %s35, 0
      %p277 = por %p275, %p276
      %s279 = sadd.s32 %s278, 1
      %p282 = scmp.eq.s32.totalorder %s29, 8
      %p283 = scmp.ne.s32.totalorder %s278, %s280
      %p284 = scmp.eq.s32.totalorder %s29, 0
      %p285 = por %p283, %p284
      %p286 = scmp.ne.s32.totalorder %s278, %s280
      %p287 = scmp.eq.s32.totalorder %s34, 8
      %p288 = por %p286, %p287
      %p289 = scmp.ne.s32.totalorder %s280, %s281
      %p290 = scmp.eq.s32.totalorder %s34, 0
      %p291 = por %p289, %p290
      %p292 = scmp.ne.s32.totalorder %s280, %s281
      %p293 = scmp.eq.s32.totalorder %s35, 8
      %p294 = por %p292, %p293
      %p296 = scmp.ne.s32.totalorder %s281, %s295
      %p297 = scmp.eq.s32.totalorder %s35, 0
      %p298 = por %p296, %p297
      %s300 = sadd.s32 %s299, 1
      %p303 = scmp.eq.s32.totalorder %s29, 8
      %p304 = scmp.ne.s32.totalorder %s299, %s301
      %p305 = scmp.eq.s32.totalorder %s29, 0
      %p306 = por %p304, %p305
      %p307 = scmp.ne.s32.totalorder %s299, %s301
      %p308 = scmp.eq.s32.totalorder %s34, 8
      %p309 = por %p307, %p308
      %p310 = scmp.ne.s32.totalorder %s301, %s302
      %p311 = scmp.eq.s32.totalorder %s34, 0
      %p312 = por %p310, %p311
      %p313 = scmp.ne.s32.totalorder %s301, %s302
      %p314 = scmp.eq.s32.totalorder %s35, 8
      %p315 = por %p313, %p314
      %p317 = scmp.ne.s32.totalorder %s302, %s316
      %p318 = scmp.eq.s32.totalorder %s35, 0
      %p319 = por %p317, %p318
      %s321 = sadd.s32 %s320, 1
      %p324 = scmp.eq.s32.totalorder %s29, 8
      %p325 = scmp.ne.s32.totalorder %s320, %s322
      %p326 = scmp.eq.s32.totalorder %s29, 0
      %p327 = por %p325, %p326
      %p328 = scmp.ne.s32.totalorder %s320, %s322
      %p329 = scmp.eq.s32.totalorder %s34, 8
      %p330 = por %p328, %p329
      %p331 = scmp.ne.s32.totalorder %s322, %s323
      %p332 = scmp.eq.s32.totalorder %s34, 0
      %p333 = por %p331, %p332
      %p334 = scmp.ne.s32.totalorder %s322, %s323
      %p335 = scmp.eq.s32.totalorder %s35, 8
      %p336 = por %p334, %p335
      %p338 = scmp.ne.s32.totalorder %s323, %s337
      %p339 = scmp.eq.s32.totalorder %s35, 0
      %p340 = por %p338, %p339
      %s342 = sadd.s32 %s341, 1
      %p345 = scmp.eq.s32.totalorder %s29, 8
      %p346 = scmp.ne.s32.totalorder %s341, %s343
      %p347 = scmp.eq.s32.totalorder %s29, 0
      %p348 = por %p346, %p347
      %p349 = scmp.ne.s32.totalorder %s341, %s343
      %p350 = scmp.eq.s32.totalorder %s34, 8
      %p351 = por %p349, %p350
      %p352 = scmp.ne.s32.totalorder %s343, %s344
      %p353 = scmp.eq.s32.totalorder %s34, 0
      %p354 = por %p352, %p353
      %p355 = scmp.ne.s32.totalorder %s343, %s344
      %p356 = scmp.eq.s32.totalorder %s35, 8
      %p357 = por %p355, %p356
      %p359 = scmp.ne.s32.totalorder %s344, %s358
      %p360 = scmp.eq.s32.totalorder %s35, 0
      %p361 = por %p359, %p360
      %p362 = scmp.le.s32.totalorder 1, %s29
      %p363 = scmp.lt.s32.totalorder %s29, 10
      %p364 = pnand %p362, %p363
      %p365 = pneg %p364
      // Predicated region
      $region9: #{nasnet_wrapper_forward.1} parent=5 // pred_check
        _
      $region10: #{nasnet_wrapper_forward.1} parent=5 // pred_check_branch
        %367 = sbr.rel (%p364) target = $region12
      $region11: #{nasnet_wrapper_forward.1} parent=5 // pred_region
        %s368 = ssub.s32 %s29, 1
        // Predicated region
        $region13: #{nasnet_wrapper_forward.1} parent=11 // pred_check
          %p369 = pneg %p102
        $region14: #{nasnet_wrapper_forward.1} parent=11 // pred_check_branch
          %371 = sbr.rel (%p369) target = $region16
        $region15: #{nasnet_wrapper_forward.1} parent=11 // pred_region
          _
        $region16: #{nasnet_wrapper_forward.1} parent=11 // pred_fallthru
          _
        // Predicated region
        $region17: #{nasnet_wrapper_forward.1} parent=11 // pred_check
          %p372 = pneg %p123
        $region18: #{nasnet_wrapper_forward.1} parent=11 // pred_check_branch
          %374 = sbr.rel (%p372) target = $region20
        $region19: #{nasnet_wrapper_forward.1} parent=11 // pred_region
          %s376 = ssub.s32 6912, 6912
          %377 = vsyncadd [#allocation7], %s376
          %s378 = sshll.u32 [#allocation6], 4
          %s379 = int_to_ptr.vmem [resolvable:$true] %s378
          %384 = dma.hbm_to_vmem [thread:$0]  %s3, 6912, %s379, [#allocation7], 1152, 1152, 72
        $region20: #{nasnet_wrapper_forward.1} parent=11 // pred_fallthru
          _
        // Predicated region
        $region21: #{nasnet_wrapper_forward.1} parent=11 // pred_check
          %p385 = pneg %p144
        $region22: #{nasnet_wrapper_forward.1} parent=11 // pred_check_branch
          %387 = sbr.rel (%p385) target = $region24
        $region23: #{nasnet_wrapper_forward.1} parent=11 // pred_region
          %s389 = ssub.s32 144, 144
          %390 = vsyncadd [#allocation7], %s389
          %s392 = sshll.u32 [#allocation8], 4
          %s393 = int_to_ptr.vmem [resolvable:$true] %s392
          %395 = dma.hbm_to_vmem [thread:$0]  %s4, 144, %s393, [#allocation7]
        $region24: #{nasnet_wrapper_forward.1} parent=11 // pred_fallthru
          _
        // Predicated region
        $region25: #{nasnet_wrapper_forward.1} parent=11 // pred_check
          %p396 = pneg %p165
        $region26: #{nasnet_wrapper_forward.1} parent=11 // pred_check_branch
          %398 = sbr.rel (%p396) target = $region28
        $region27: #{nasnet_wrapper_forward.1} parent=11 // pred_region
          %s400 = ssub.s32 32, 32
          %401 = vsyncadd [#allocation10], %s400
          %s403 = sshll.u32 [#allocation9], 4
          %s404 = int_to_ptr.vmem [resolvable:$true] %s403
          %406 = dma.hbm_to_vmem [thread:$0]  %s5, 32, %s404, [#allocation10]
        $region28: #{nasnet_wrapper_forward.1} parent=11 // pred_fallthru
          _
        // Predicated region
        $region29: #{nasnet_wrapper_forward.1} parent=11 // pred_check
          %p407 = pneg %p186
        $region30: #{nasnet_wrapper_forward.1} parent=11 // pred_check_branch
          %409 = sbr.rel (%p407) target = $region32
        $region31: #{nasnet_wrapper_forward.1} parent=11 // pred_region
          %s411 = ssub.s32 32, 32
          %412 = vsyncadd [#allocation10], %s411
          %s414 = sshll.u32 [#allocation11], 4
          %s415 = int_to_ptr.vmem [resolvable:$true] %s414
          %417 = dma.hbm_to_vmem [thread:$0]  %s6, 32, %s415, [#allocation10]
        $region32: #{nasnet_wrapper_forward.1} parent=11 // pred_fallthru
          _
        // Predicated region
        $region33: #{nasnet_wrapper_forward.1} parent=11 // pred_check
          %p418 = pneg %p207
        $region34: #{nasnet_wrapper_forward.1} parent=11 // pred_check_branch
          %420 = sbr.rel (%p418) target = $region36
        $region35: #{nasnet_wrapper_forward.1} parent=11 // pred_region
          %s422 = ssub.s32 32, 32
          %423 = vsyncadd [#allocation13], %s422
          %s425 = sshll.u32 [#allocation12], 4
          %s426 = int_to_ptr.vmem [resolvable:$true] %s425
          %428 = dma.hbm_to_vmem [thread:$0]  %s7, 32, %s426, [#allocation13]
        $region36: #{nasnet_wrapper_forward.1} parent=11 // pred_fallthru
          _
        // Predicated region
        $region37: #{nasnet_wrapper_forward.1} parent=11 // pred_check
          %p429 = pneg %p228
        $region38: #{nasnet_wrapper_forward.1} parent=11 // pred_check_branch
          %431 = sbr.rel (%p429) target = $region40
        $region39: #{nasnet_wrapper_forward.1} parent=11 // pred_region
          _
        $region40: #{nasnet_wrapper_forward.1} parent=11 // pred_fallthru
          _
        // Predicated region
        $region41: #{nasnet_wrapper_forward.1} parent=11 // pred_check
          %p432 = pneg %p249
        $region42: #{nasnet_wrapper_forward.1} parent=11 // pred_check_branch
          %434 = sbr.rel (%p432) target = $region44
        $region43: #{nasnet_wrapper_forward.1} parent=11 // pred_region
          %s436 = ssub.s32 16, 16
          %437 = vsyncadd [#allocation13], %s436
          %s439 = sshll.u32 [#allocation14], 4
          %s440 = int_to_ptr.vmem [resolvable:$true] %s439
          %442 = dma.hbm_to_vmem [thread:$0]  %s9, 16, %s440, [#allocation13]
        $region44: #{nasnet_wrapper_forward.1} parent=11 // pred_fallthru
          _
        // Predicated region
        $region45: #{nasnet_wrapper_forward.1} parent=11 // pred_check
          %p443 = pneg %p270
        $region46: #{nasnet_wrapper_forward.1} parent=11 // pred_check_branch
          %445 = sbr.rel (%p443) target = $region48
        $region47: #{nasnet_wrapper_forward.1} parent=11 // pred_region
          %s447 = ssub.s32 16, 16
          %448 = vsyncadd [#allocation16], %s447
          %s450 = sshll.u32 [#allocation15], 4
          %s451 = int_to_ptr.vmem [resolvable:$true] %s450
          %453 = dma.hbm_to_vmem [thread:$0]  %s10, 16, %s451, [#allocation16]
        $region48: #{nasnet_wrapper_forward.1} parent=11 // pred_fallthru
          _
        // Predicated region
        $region49: #{nasnet_wrapper_forward.1} parent=11 // pred_check
          %p454 = pneg %p291
        $region50: #{nasnet_wrapper_forward.1} parent=11 // pred_check_branch
          %456 = sbr.rel (%p454) target = $region52
        $region51: #{nasnet_wrapper_forward.1} parent=11 // pred_region
          %s458 = ssub.s32 16, 16
          %459 = vsyncadd [#allocation16], %s458
          %s461 = sshll.u32 [#allocation17], 4
          %s462 = int_to_ptr.vmem [resolvable:$true] %s461
          %464 = dma.hbm_to_vmem [thread:$0]  %s11, 16, %s462, [#allocation16]
        $region52: #{nasnet_wrapper_forward.1} parent=11 // pred_fallthru
          _
        // Predicated region
        $region53: #{nasnet_wrapper_forward.1} parent=11 // pred_check
          %p465 = pneg %p312
        $region54: #{nasnet_wrapper_forward.1} parent=11 // pred_check_branch
          %467 = sbr.rel (%p465) target = $region56
        $region55: #{nasnet_wrapper_forward.1} parent=11 // pred_region
          _
        $region56: #{nasnet_wrapper_forward.1} parent=11 // pred_fallthru
          _
        // Predicated region
        $region57: #{nasnet_wrapper_forward.1} parent=11 // pred_check
          %p468 = pneg %p333
        $region58: #{nasnet_wrapper_forward.1} parent=11 // pred_check_branch
          %470 = sbr.rel (%p468) target = $region60
        $region59: #{nasnet_wrapper_forward.1} parent=11 // pred_region
          %s472 = ssub.s32 16, 16
          %473 = vsyncadd [#allocation19], %s472
          %s475 = sshll.u32 [#allocation18], 4
          %s476 = int_to_ptr.vmem [resolvable:$true] %s475
          %478 = dma.hbm_to_vmem [thread:$0]  %s13, 16, %s476, [#allocation19]
        $region60: #{nasnet_wrapper_forward.1} parent=11 // pred_fallthru
          _
      $region12: #{nasnet_wrapper_forward.1} parent=5 // pred_fallthru
        _
      %p479 = scmp.lt.s32.totalorder %s29, 9
      // Predicated region
      $region61: #{nasnet_wrapper_forward.1} parent=5 // pred_check
        %p480 = pneg %p479
      $region62: #{nasnet_wrapper_forward.1} parent=5 // pred_check_branch
        %482 = sbr.rel (%p480) target = $region64
      $region63: #{nasnet_wrapper_forward.1} parent=5 // pred_region
        // Predicated region
        $region65: #{nasnet_wrapper_forward.1} parent=63 // pred_check
          %p483 = pneg %p49
        $region66: #{nasnet_wrapper_forward.1} parent=63 // pred_check_branch
          %485 = sbr.rel (%p483) target = $region68
        $region67: #{nasnet_wrapper_forward.1} parent=63 // pred_region
          %p486 = scmp.lt.s32.totalorder %s29, 8
          %s487 = scalar_select %p486, %s29, 8
          %s488 = smul.addr %s487, 2
          %s489 = scalar_lea.vmem %s0, %s488
        $region68: #{nasnet_wrapper_forward.1} parent=63 // pred_fallthru
          _
        // Predicated region
        $region69: #{nasnet_wrapper_forward.1} parent=63 // pred_check
          %p490 = pneg %p75
        $region70: #{nasnet_wrapper_forward.1} parent=63 // pred_check_branch
          %492 = sbr.rel (%p490) target = $region72
        $region71: #{nasnet_wrapper_forward.1} parent=63 // pred_region
          %s493 = sand.u32 %s65, 1
          %s494 = scalar_lea.sflag [#allocation4], %s493
          %s495 = sand.u32 %s65, 1
          %s496 = smul.addr %s495, 2112
          %s497 = scalar_lea.vmem [#allocation3], %s496
          %s499 = ssub.s32 33792, 33792
          %500 = vsyncadd %s494, %s499
          %s501 = smul.addr %s29, 264
          %s502 = smul.addr %s501, 128
          %s503 = scalar_lea.hbm %s1, %s502
          %s504 = sshll.u32 %s497, 4
          %s505 = int_to_ptr.vmem [resolvable:$true] %s504
          %510 = dma.hbm_to_vmem [thread:$0]  %s503, 33792, %s505, %s494, 256, 256, 16
        $region72: #{nasnet_wrapper_forward.1} parent=63 // pred_fallthru
          _
      $region64: #{nasnet_wrapper_forward.1} parent=5 // pred_fallthru
        _
      %p511 = scmp.le.s32.totalorder 1, %s29
      %p512 = scmp.lt.s32.totalorder %s29, 10
      %p513 = pnand %p511, %p512
      %p514 = pneg %p513
      // Predicated region
      $region73: #{nasnet_wrapper_forward.1} parent=5 // pred_check
        _
      $region74: #{nasnet_wrapper_forward.1} parent=5 // pred_check_branch
        %516 = sbr.rel (%p513) target = $region76
      $region75: #{nasnet_wrapper_forward.1} parent=5 // pred_region
        %s517 = ssub.s32 %s29, 1
        %s518 = sand.u32 %s68, 1
        %s519 = scalar_lea.sflag [#allocation4], %s518
        %s520 = sand.u32 %s68, 1
        %s521 = smul.addr %s520, 2112
        %s522 = scalar_lea.vmem [#allocation3], %s521
        // Predicated region
        $region77: #{nasnet_wrapper_forward.1} parent=75 // pred_check
          %p523 = pneg %p81
        $region78: #{nasnet_wrapper_forward.1} parent=75 // pred_check_branch
          %525 = sbr.rel (%p523) target = $region80
        $region79: #{nasnet_wrapper_forward.1} parent=75 // pred_region
          %526 = dma.done %s519, 33792
        $region80: #{nasnet_wrapper_forward.1} parent=75 // pred_fallthru
          _
        // Predicated region
        $region81: #{nasnet_wrapper_forward.1} parent=75 // pred_check
          %p527 = pneg %p123
        $region82: #{nasnet_wrapper_forward.1} parent=75 // pred_check_branch
          %529 = sbr.rel (%p527) target = $region84
        $region83: #{nasnet_wrapper_forward.1} parent=75 // pred_region
          %530 = dma.done [#allocation7], 6912
        $region84: #{nasnet_wrapper_forward.1} parent=75 // pred_fallthru
          _
        // Predicated region
        $region85: #{nasnet_wrapper_forward.1} parent=75 // pred_check
          %p531 = pneg %p144
        $region86: #{nasnet_wrapper_forward.1} parent=75 // pred_check_branch
          %533 = sbr.rel (%p531) target = $region88
        $region87: #{nasnet_wrapper_forward.1} parent=75 // pred_region
          %534 = dma.done [#allocation7], 144
        $region88: #{nasnet_wrapper_forward.1} parent=75 // pred_fallthru
          _
        // Predicated region
        $region89: #{nasnet_wrapper_forward.1} parent=75 // pred_check
          %p535 = pneg %p165
        $region90: #{nasnet_wrapper_forward.1} parent=75 // pred_check_branch
          %537 = sbr.rel (%p535) target = $region92
        $region91: #{nasnet_wrapper_forward.1} parent=75 // pred_region
          %538 = dma.done [#allocation10], 32
        $region92: #{nasnet_wrapper_forward.1} parent=75 // pred_fallthru
          _
        // Predicated region
        $region93: #{nasnet_wrapper_forward.1} parent=75 // pred_check
          %p539 = pneg %p186
        $region94: #{nasnet_wrapper_forward.1} parent=75 // pred_check_branch
          %541 = sbr.rel (%p539) target = $region96
        $region95: #{nasnet_wrapper_forward.1} parent=75 // pred_region
          %542 = dma.done [#allocation10], 32
        $region96: #{nasnet_wrapper_forward.1} parent=75 // pred_fallthru
          _
        // Predicated region
        $region97: #{nasnet_wrapper_forward.1} parent=75 // pred_check
          %p543 = pneg %p207
        $region98: #{nasnet_wrapper_forward.1} parent=75 // pred_check_branch
          %545 = sbr.rel (%p543) target = $region100
        $region99: #{nasnet_wrapper_forward.1} parent=75 // pred_region
          %546 = dma.done [#allocation13], 32
        $region100: #{nasnet_wrapper_forward.1} parent=75 // pred_fallthru
          _
        // Predicated region
        $region101: #{nasnet_wrapper_forward.1} parent=75 // pred_check
          %p547 = pneg %p249
        $region102: #{nasnet_wrapper_forward.1} parent=75 // pred_check_branch
          %549 = sbr.rel (%p547) target = $region104
        $region103: #{nasnet_wrapper_forward.1} parent=75 // pred_region
          %550 = dma.done [#allocation13], 16
        $region104: #{nasnet_wrapper_forward.1} parent=75 // pred_fallthru
          _
        // Predicated region
        $region105: #{nasnet_wrapper_forward.1} parent=75 // pred_check
          %p551 = pneg %p270
        $region106: #{nasnet_wrapper_forward.1} parent=75 // pred_check_branch
          %553 = sbr.rel (%p551) target = $region108
        $region107: #{nasnet_wrapper_forward.1} parent=75 // pred_region
          %554 = dma.done [#allocation16], 16
        $region108: #{nasnet_wrapper_forward.1} parent=75 // pred_fallthru
          _
        // Predicated region
        $region109: #{nasnet_wrapper_forward.1} parent=75 // pred_check
          %p555 = pneg %p291
        $region110: #{nasnet_wrapper_forward.1} parent=75 // pred_check_branch
          %557 = sbr.rel (%p555) target = $region112
        $region111: #{nasnet_wrapper_forward.1} parent=75 // pred_region
          %558 = dma.done [#allocation16], 16
        $region112: #{nasnet_wrapper_forward.1} parent=75 // pred_fallthru
          _
        // Predicated region
        $region113: #{nasnet_wrapper_forward.1} parent=75 // pred_check
          %p559 = pneg %p333
        $region114: #{nasnet_wrapper_forward.1} parent=75 // pred_check_branch
          %561 = sbr.rel (%p559) target = $region116
        $region115: #{nasnet_wrapper_forward.1} parent=75 // pred_region
          %562 = dma.done [#allocation19], 16
        $region116: #{nasnet_wrapper_forward.1} parent=75 // pred_fallthru
          _
        %p563 = scmp.lt.s32.totalorder %s34, 8
        %s564 = scalar_select %p563, %s34, 8
        %s565 = smul.addr %s564, 2
        %s566 = scalar_lea.vmem %s0, %s565
        %p567 = pneg %p55
        %p568 = pneg %p52
        %s569 = sand.u32 %s68, 1
        %s570 = scalar_lea.sflag [#allocation4], %s569
        %s571 = sand.u32 %s68, 1
        %s572 = smul.addr %s571, 2112
        %s573 = scalar_lea.vmem [#allocation3], %s572
        %p574 = pneg %p81
        %p575 = pneg %p78
        %p576 = pneg %p102
        %p577 = pneg %p99
        %p578 = pneg %p123
        %p579 = pneg %p120
        %p580 = pneg %p144
        %p581 = pneg %p141
        %p582 = pneg %p165
        %p583 = pneg %p162
        %p584 = pneg %p186
        %p585 = pneg %p183
        %p586 = pneg %p207
        %p587 = pneg %p204
        %p588 = pneg %p228
        %p589 = pneg %p225
        %p590 = pneg %p249
        %p591 = pneg %p246
        %p592 = pneg %p270
        %p593 = pneg %p267
        %p594 = pneg %p291
        %p595 = pneg %p288
        %p596 = pneg %p312
        %p597 = pneg %p309
        %p598 = pneg %p333
        %p599 = pneg %p330
        %p600 = pneg %p354
        %p601 = pneg %p351
        %p602 = scmp.lt.s32.totalorder %s34, 8
        %s603 = scalar_select %p602, %s34, 8
        %s604 = smul.addr %s603, 2
        %s605 = scalar_lea.vmem %s0, %s604
        %p606 = scmp.eq.s32.totalorder %s34, 0
        // Predicated region
        $region117: #{nasnet_wrapper_forward.1} parent=75 // pred_check
          %p607 = pneg %p606
        $region118: #{nasnet_wrapper_forward.1} parent=75 // pred_check_branch
          %609 = sbr.rel (%p607) target = $region120
        $region119: #{nasnet_wrapper_forward.1} parent=75 // pred_region
          %610 = vst [vmem:[#allocation2] sm:$0xf] 0.0
        $region120: #{nasnet_wrapper_forward.1} parent=75 // pred_fallthru
          _
        %v611 = vld [vmem:[%s605] sm:$0x3]
        %v612 = vld [vmem:[#allocation6] sm:$0xff]
        %v613 = vld [vmem:[#allocation6 + $0x8] sm:$0xff]
        %v614 = vld [vmem:[#allocation6 + $0x10] sm:$0xff]
        %v615 = vld [vmem:[#allocation6 + $0x18] sm:$0xff]
        %v616 = vld [vmem:[#allocation6 + $0x20] sm:$0xff]
        %v617 = vld [vmem:[#allocation6 + $0x28] sm:$0xff]
        %v618 = vld [vmem:[#allocation6 + $0x30] sm:$0xff]
        %v619 = vld [vmem:[#allocation6 + $0x38] sm:$0xff]
        %v620 = vld [vmem:[#allocation6 + $0x40] sm:$0xff]
        %v621 = vld [vmem:[#allocation6 + $0x48] sm:$0xff]
        %v622 = vld [vmem:[#allocation6 + $0x50] sm:$0xff]
        %v623 = vld [vmem:[#allocation6 + $0x58] sm:$0xff]
        %v624 = vld [vmem:[#allocation6 + $0x60] sm:$0xff]
        %v625 = vld [vmem:[#allocation6 + $0x68] sm:$0xff]
        %v626 = vld [vmem:[#allocation6 + $0x70] sm:$0xff]
        %v627 = vld [vmem:[#allocation6 + $0x78] sm:$0xff]
        %v628 = vld [vmem:[#allocation6 + $0x80] sm:$0xff]
        %v629 = vld [vmem:[#allocation6 + $0x88] sm:$0xff]
        %v630 = vld [vmem:[#allocation6 + $0x90] sm:$0xff]
        %v631 = vld [vmem:[#allocation6 + $0x98] sm:$0xff]
        %v632 = vld [vmem:[#allocation6 + $0xa0] sm:$0xff]
        %v633 = vld [vmem:[#allocation6 + $0xa8] sm:$0xff]
        %v634 = vld [vmem:[#allocation6 + $0xb0] sm:$0xff]
        %v635 = vld [vmem:[#allocation6 + $0xb8] sm:$0xff]
        %v636 = vld [vmem:[#allocation6 + $0xc0] sm:$0xff]
        %v637 = vld [vmem:[#allocation6 + $0xc8] sm:$0xff]
        %v638 = vld [vmem:[#allocation6 + $0xd0] sm:$0xff]
        %v639 = vld [vmem:[#allocation6 + $0xd8] sm:$0xff]
        %v640 = vld [vmem:[#allocation6 + $0xe0] sm:$0xff]
        %v641 = vld [vmem:[#allocation6 + $0xe8] sm:$0xff]
        %v642 = vld [vmem:[#allocation6 + $0xf0] sm:$0xff]
        %v643 = vld [vmem:[#allocation6 + $0xf8] sm:$0xff]
        %v644 = vld [vmem:[#allocation6 + $0x100] sm:$0xff]
        %v645 = vld [vmem:[#allocation6 + $0x108] sm:$0xff]
        %v646 = vld [vmem:[#allocation6 + $0x110] sm:$0xff]
        %v647 = vld [vmem:[#allocation6 + $0x118] sm:$0xff]
        %v648 = vld [vmem:[#allocation6 + $0x120] sm:$0xff]
        %v649 = vld [vmem:[#allocation6 + $0x128] sm:$0xff]
        %v650 = vld [vmem:[#allocation6 + $0x130] sm:$0xff]
        %v651 = vld [vmem:[#allocation6 + $0x138] sm:$0xff]
        %v652 = vld [vmem:[#allocation6 + $0x140] sm:$0xff]
        %v653 = vld [vmem:[#allocation6 + $0x148] sm:$0xff]
        %v654 = vld [vmem:[#allocation6 + $0x150] sm:$0xff]
        %v655 = vld [vmem:[#allocation6 + $0x158] sm:$0xff]
        %v656 = vld [vmem:[#allocation6 + $0x160] sm:$0xff]
        %v657 = vld [vmem:[#allocation6 + $0x168] sm:$0xff]
        %v658 = vld [vmem:[#allocation6 + $0x170] sm:$0xff]
        %v659 = vld [vmem:[#allocation6 + $0x178] sm:$0xff]
        %v660 = vld [vmem:[#allocation6 + $0x180] sm:$0xff]
        %v661 = vld [vmem:[#allocation6 + $0x188] sm:$0xff]
        %v662 = vld [vmem:[#allocation6 + $0x190] sm:$0xff]
        %v663 = vld [vmem:[#allocation6 + $0x198] sm:$0xff]
        %v664 = vld [vmem:[#allocation6 + $0x1a0] sm:$0xff]
        %v665 = vld [vmem:[#allocation6 + $0x1a8] sm:$0xff]
        %v666 = vld [vmem:[#allocation8] sm:$0xff]
        %v667 = vld [vmem:[#allocation8 + $0x8] sm:$0x1]
        %v670 = vlaneseq
        %v671 = vshrl.u32 %v670, 7
        %v672 = vsub.s32 0, %v671
        %v673 = vrot.slane %v666, %v672
        %v674 = vlaneseq
        %v675 = vshrl.u32 %v674, 7
        %v676 = vsub.s32 1, %v675
        %v677 = vrot.slane %v666, %v676
        %v678 = vlaneseq
        %v679 = vshrl.u32 %v678, 7
        %v680 = vsub.s32 2, %v679
        %v681 = vrot.slane %v666, %v680
        %v682 = vlaneseq
        %v683 = vshrl.u32 %v682, 7
        %v684 = vsub.s32 3, %v683
        %v685 = vrot.slane %v666, %v684
        %v686 = vlaneseq
        %v687 = vshrl.u32 %v686, 7
        %v688 = vsub.s32 4, %v687
        %v689 = vrot.slane %v666, %v688
        %v690 = vlaneseq
        %v691 = vshrl.u32 %v690, 7
        %v692 = vsub.s32 5, %v691
        %v693 = vrot.slane %v666, %v692
        %v694 = vlaneseq
        %v695 = vshrl.u32 %v694, 7
        %v696 = vsub.s32 6, %v695
        %v697 = vrot.slane %v666, %v696
        %v698 = vlaneseq
        %v699 = vshrl.u32 %v698, 7
        %v700 = vsub.s32 7, %v699
        %v701 = vrot.slane %v666, %v700
        %v702 = vlaneseq
        %v703 = vshrl.u32 %v702, 7
        %v704 = vsub.s32 0, %v703
        %v705 = vrot.slane %v667, %v704
        %vm715 = vcmask 392192
        %v717 = vsel %vm715, %v611, 0
        %719 = vmatprep.subr.mxu0 0.0
        %720 = vmatpush1.msra.mxu0 0.0
        %721 = vmatprep.subr.mxu0 0.0
        %722 = vmatpush1.msra.mxu0 0.0
        %723 = vmatprep.subr.mxu0 0.0
        %724 = vmatpush1.msra.mxu0 0.0
        %725 = vmatprep.subr.mxu0 0.0
        %726 = vmatpush1.msra.mxu0 0.0
        %727 = vmatprep.subr.mxu0 0.0
        %728 = vmatpush1.msra.mxu0 0.0
        %729 = vmatprep.subr.mxu0 0.0
        %730 = vmatpush1.msra.mxu0 0.0
        %731 = vmatprep.subr.mxu0 0.0
        %732 = vmatpush1.msra.mxu0 0.0
        %733 = vmatprep.subr.mxu0 0.0
        %734 = vmatpush1.msra.mxu0 0.0
        %735 = vmatprep.subr.mxu0 0.0
        %736 = vmatpush1.msra.mxu0 0.0
        %737 = vmatprep.subr.mxu0 0.0
        %738 = vmatpush1.msra.mxu0 0.0
        %739 = vmatprep.subr.mxu0 %v658
        %740 = vmatpush1.msra.mxu0 %v657
        %741 = vmatprep.subr.mxu0 %v649
        %742 = vmatpush1.msra.mxu0 %v648
        %743 = vmatprep.subr.mxu0 %v640
        %744 = vmatpush1.msra.mxu0 %v639
        %745 = vmatprep.subr.mxu0 %v631
        %746 = vmatpush1.msra.mxu0 %v630
        %747 = vmatprep.subr.mxu0 %v622
        %748 = vmatpush1.msra.mxu0 %v621
        %749 = vmatprep.subr.mxu0 %v613
        %750 = vmatpush1.msra.mxu0 %v612
        %751 = vmatprep.subr.mxu0 0.0
        %752 = vmatpush2.msra.mxu0 0.0
        %753 = vmatprep.subr.mxu0 0.0
        %754 = vmatpush2.msra.mxu0 0.0
        %755 = vmatprep.subr.mxu0 0.0
        %756 = vmatpush2.msra.mxu0 0.0
        %757 = vmatprep.subr.mxu0 0.0
        %758 = vmatpush2.msra.mxu0 0.0
        %759 = vmatprep.subr.mxu0 0.0
        %760 = vmatpush2.msra.mxu0 0.0
        %761 = vmatprep.subr.mxu0 0.0
        %762 = vmatpush2.msra.mxu0 0.0
        %763 = vmatprep.subr.mxu0 0.0
        %764 = vmatpush2.msra.mxu0 0.0
        %765 = vmatprep.subr.mxu0 0.0
        %766 = vmatpush2.msra.mxu0 0.0
        %767 = vmatprep.subr.mxu0 0.0
        %768 = vmatpush2.msra.mxu0 0.0
        %769 = vmatprep.subr.mxu0 0.0
        %770 = vmatpush2.msra.mxu0 0.0
        %771 = vmatprep.subr.mxu0 0.0
        %772 = vmatpush2.msra.mxu0 0.0
        %773 = vmatprep.subr.mxu0 0.0
        %774 = vmatpush2.msra.mxu0 0.0
        %775 = vmatprep.subr.mxu0 0.0
        %776 = vmatpush2.msra.mxu0 0.0
        %777 = vmatprep.subr.mxu0 0.0
        %778 = vmatpush2.msra.mxu0 0.0
        %779 = vmatprep.subr.mxu0 0.0
        %780 = vmatpush2.msra.mxu0 0.0
        %781 = vmatprep.subr.mxu0 0.0
        %782 = vmatpush2.msra.mxu0 0.0
        %783 = vmatprep.mubr.f32.mxu0 0.0
        %784 = vmatmul.mubr.f32.gmra.mxu0 %v717
        %v785 = vpop.f32.mrf.mxu0
        %v786 = vadd.f32 %v673, %v785
        %v787 = vpop.f32.mrf.mxu0
        %v788 = vadd.f32 %v677, %v787
        %789 = vdwg.mxu0
        %790 = vmatprep.subr.mxu0 0.0
        %791 = vmatpush1.msra.mxu0 0.0
        %792 = vmatprep.subr.mxu0 0.0
        %793 = vmatpush1.msra.mxu0 0.0
        %794 = vmatprep.subr.mxu0 0.0
        %795 = vmatpush1.msra.mxu0 0.0
        %796 = vmatprep.subr.mxu0 0.0
        %797 = vmatpush1.msra.mxu0 0.0
        %798 = vmatprep.subr.mxu0 0.0
        %799 = vmatpush1.msra.mxu0 0.0
        %800 = vmatprep.subr.mxu0 0.0
        %801 = vmatpush1.msra.mxu0 0.0
        %802 = vmatprep.subr.mxu0 0.0
        %803 = vmatpush1.msra.mxu0 0.0
        %804 = vmatprep.subr.mxu0 0.0
        %805 = vmatpush1.msra.mxu0 0.0
        %806 = vmatprep.subr.mxu0 0.0
        %807 = vmatpush1.msra.mxu0 0.0
        %808 = vmatprep.subr.mxu0 0.0
        %809 = vmatpush1.msra.mxu0 0.0
        %810 = vmatprep.subr.mxu0 %v660
        %811 = vmatpush1.msra.mxu0 %v659
        %812 = vmatprep.subr.mxu0 %v651
        %813 = vmatpush1.msra.mxu0 %v650
        %814 = vmatprep.subr.mxu0 %v642
        %815 = vmatpush1.msra.mxu0 %v641
        %816 = vmatprep.subr.mxu0 %v633
        %817 = vmatpush1.msra.mxu0 %v632
        %818 = vmatprep.subr.mxu0 %v624
        %819 = vmatpush1.msra.mxu0 %v623
        %820 = vmatprep.subr.mxu0 %v615
        %821 = vmatpush1.msra.mxu0 %v614
        %822 = vmatprep.subr.mxu0 0.0
        %823 = vmatpush2.msra.mxu0 0.0
        %824 = vmatprep.subr.mxu0 0.0
        %825 = vmatpush2.msra.mxu0 0.0
        %826 = vmatprep.subr.mxu0 0.0
        %827 = vmatpush2.msra.mxu0 0.0
        %828 = vmatprep.subr.mxu0 0.0
        %829 = vmatpush2.msra.mxu0 0.0
        %830 = vmatprep.subr.mxu0 0.0
        %831 = vmatpush2.msra.mxu0 0.0
        %832 = vmatprep.subr.mxu0 0.0
        %833 = vmatpush2.msra.mxu0 0.0
        %834 = vmatprep.subr.mxu0 0.0
        %835 = vmatpush2.msra.mxu0 0.0
        %836 = vmatprep.subr.mxu0 0.0
        %837 = vmatpush2.msra.mxu0 0.0
        %838 = vmatprep.subr.mxu0 0.0
        %839 = vmatpush2.msra.mxu0 0.0
        %840 = vmatprep.subr.mxu0 0.0
        %841 = vmatpush2.msra.mxu0 0.0
        %842 = vmatprep.subr.mxu0 0.0
        %843 = vmatpush2.msra.mxu0 0.0
        %844 = vmatprep.subr.mxu0 0.0
        %845 = vmatpush2.msra.mxu0 0.0
        %846 = vmatprep.subr.mxu0 0.0
        %847 = vmatpush2.msra.mxu0 0.0
        %848 = vmatprep.subr.mxu0 0.0
        %849 = vmatpush2.msra.mxu0 0.0
        %850 = vmatprep.subr.mxu0 0.0
        %851 = vmatpush2.msra.mxu0 0.0
        %852 = vmatprep.subr.mxu0 0.0
        %853 = vmatpush2.msra.mxu0 0.0
        %854 = vmatprep.mubr.f32.mxu0 0.0
        %855 = vmatmul.mubr.f32.gmra.mxu0 %v717
        %v856 = vpop.f32.mrf.mxu0
        %v857 = vadd.f32 %v681, %v856
        %v858 = vpop.f32.mrf.mxu0
        %v859 = vadd.f32 %v685, %v858
        %860 = vdwg.mxu0
        %861 = vmatprep.subr.mxu0 0.0
        %862 = vmatpush1.msra.mxu0 0.0
        %863 = vmatprep.subr.mxu0 0.0
        %864 = vmatpush1.msra.mxu0 0.0
        %865 = vmatprep.subr.mxu0 0.0
        %866 = vmatpush1.msra.mxu0 0.0
        %867 = vmatprep.subr.mxu0 0.0
        %868 = vmatpush1.msra.mxu0 0.0
        %869 = vmatprep.subr.mxu0 0.0
        %870 = vmatpush1.msra.mxu0 0.0
        %871 = vmatprep.subr.mxu0 0.0
        %872 = vmatpush1.msra.mxu0 0.0
        %873 = vmatprep.subr.mxu0 0.0
        %874 = vmatpush1.msra.mxu0 0.0
        %875 = vmatprep.subr.mxu0 0.0
        %876 = vmatpush1.msra.mxu0 0.0
        %877 = vmatprep.subr.mxu0 0.0
        %878 = vmatpush1.msra.mxu0 0.0
        %879 = vmatprep.subr.mxu0 0.0
        %880 = vmatpush1.msra.mxu0 0.0
        %881 = vmatprep.subr.mxu0 %v662
        %882 = vmatpush1.msra.mxu0 %v661
        %883 = vmatprep.subr.mxu0 %v653
        %884 = vmatpush1.msra.mxu0 %v652
        %885 = vmatprep.subr.mxu0 %v644
        %886 = vmatpush1.msra.mxu0 %v643
        %887 = vmatprep.subr.mxu0 %v635
        %888 = vmatpush1.msra.mxu0 %v634
        %889 = vmatprep.subr.mxu0 %v626
        %890 = vmatpush1.msra.mxu0 %v625
        %891 = vmatprep.subr.mxu0 %v617
        %892 = vmatpush1.msra.mxu0 %v616
        %893 = vmatprep.subr.mxu0 0.0
        %894 = vmatpush2.msra.mxu0 0.0
        %895 = vmatprep.subr.mxu0 0.0
        %896 = vmatpush2.msra.mxu0 0.0
        %897 = vmatprep.subr.mxu0 0.0
        %898 = vmatpush2.msra.mxu0 0.0
        %899 = vmatprep.subr.mxu0 0.0
        %900 = vmatpush2.msra.mxu0 0.0
        %901 = vmatprep.subr.mxu0 0.0
        %902 = vmatpush2.msra.mxu0 0.0
        %903 = vmatprep.subr.mxu0 0.0
        %904 = vmatpush2.msra.mxu0 0.0
        %905 = vmatprep.subr.mxu0 0.0
        %906 = vmatpush2.msra.mxu0 0.0
        %907 = vmatprep.subr.mxu0 0.0
        %908 = vmatpush2.msra.mxu0 0.0
        %909 = vmatprep.subr.mxu0 0.0
        %910 = vmatpush2.msra.mxu0 0.0
        %911 = vmatprep.subr.mxu0 0.0
        %912 = vmatpush2.msra.mxu0 0.0
        %913 = vmatprep.subr.mxu0 0.0
        %914 = vmatpush2.msra.mxu0 0.0
        %915 = vmatprep.subr.mxu0 0.0
        %916 = vmatpush2.msra.mxu0 0.0
        %917 = vmatprep.subr.mxu0 0.0
        %918 = vmatpush2.msra.mxu0 0.0
        %919 = vmatprep.subr.mxu0 0.0
        %920 = vmatpush2.msra.mxu0 0.0
        %921 = vmatprep.subr.mxu0 0.0
        %922 = vmatpush2.msra.mxu0 0.0
        %923 = vmatprep.subr.mxu0 0.0
        %924 = vmatpush2.msra.mxu0 0.0
        %925 = vmatprep.mubr.f32.mxu0 0.0
        %926 = vmatmul.mubr.f32.gmra.mxu0 %v717
        %v927 = vpop.f32.mrf.mxu0
        %v928 = vadd.f32 %v689, %v927
        %v929 = vpop.f32.mrf.mxu0
        %v930 = vadd.f32 %v693, %v929
        %931 = vdwg.mxu0
        %932 = vmatprep.subr.mxu0 0.0
        %933 = vmatpush1.msra.mxu0 0.0
        %934 = vmatprep.subr.mxu0 0.0
        %935 = vmatpush1.msra.mxu0 0.0
        %936 = vmatprep.subr.mxu0 0.0
        %937 = vmatpush1.msra.mxu0 0.0
        %938 = vmatprep.subr.mxu0 0.0
        %939 = vmatpush1.msra.mxu0 0.0
        %940 = vmatprep.subr.mxu0 0.0
        %941 = vmatpush1.msra.mxu0 0.0
        %942 = vmatprep.subr.mxu0 0.0
        %943 = vmatpush1.msra.mxu0 0.0
        %944 = vmatprep.subr.mxu0 0.0
        %945 = vmatpush1.msra.mxu0 0.0
        %946 = vmatprep.subr.mxu0 0.0
        %947 = vmatpush1.msra.mxu0 0.0
        %948 = vmatprep.subr.mxu0 0.0
        %949 = vmatpush1.msra.mxu0 0.0
        %950 = vmatprep.subr.mxu0 0.0
        %951 = vmatpush1.msra.mxu0 0.0
        %952 = vmatprep.subr.mxu0 %v664
        %953 = vmatpush1.msra.mxu0 %v663
        %954 = vmatprep.subr.mxu0 %v655
        %955 = vmatpush1.msra.mxu0 %v654
        %956 = vmatprep.subr.mxu0 %v646
        %957 = vmatpush1.msra.mxu0 %v645
        %958 = vmatprep.subr.mxu0 %v637
        %959 = vmatpush1.msra.mxu0 %v636
        %960 = vmatprep.subr.mxu0 %v628
        %961 = vmatpush1.msra.mxu0 %v627
        %962 = vmatprep.subr.mxu0 %v619
        %963 = vmatpush1.msra.mxu0 %v618
        %964 = vmatprep.subr.mxu0 0.0
        %965 = vmatpush2.msra.mxu0 0.0
        %966 = vmatprep.subr.mxu0 0.0
        %967 = vmatpush2.msra.mxu0 0.0
        %968 = vmatprep.subr.mxu0 0.0
        %969 = vmatpush2.msra.mxu0 0.0
        %970 = vmatprep.subr.mxu0 0.0
        %971 = vmatpush2.msra.mxu0 0.0
        %972 = vmatprep.subr.mxu0 0.0
        %973 = vmatpush2.msra.mxu0 0.0
        %974 = vmatprep.subr.mxu0 0.0
        %975 = vmatpush2.msra.mxu0 0.0
        %976 = vmatprep.subr.mxu0 0.0
        %977 = vmatpush2.msra.mxu0 0.0
        %978 = vmatprep.subr.mxu0 0.0
        %979 = vmatpush2.msra.mxu0 0.0
        %980 = vmatprep.subr.mxu0 0.0
        %981 = vmatpush2.msra.mxu0 0.0
        %982 = vmatprep.subr.mxu0 0.0
        %983 = vmatpush2.msra.mxu0 0.0
        %984 = vmatprep.subr.mxu0 0.0
        %985 = vmatpush2.msra.mxu0 0.0
        %986 = vmatprep.subr.mxu0 0.0
        %987 = vmatpush2.msra.mxu0 0.0
        %988 = vmatprep.subr.mxu0 0.0
        %989 = vmatpush2.msra.mxu0 0.0
        %990 = vmatprep.subr.mxu0 0.0
        %991 = vmatpush2.msra.mxu0 0.0
        %992 = vmatprep.subr.mxu0 0.0
        %993 = vmatpush2.msra.mxu0 0.0
        %994 = vmatprep.subr.mxu0 0.0
        %995 = vmatpush2.msra.mxu0 0.0
        %996 = vmatprep.mubr.f32.mxu0 0.0
        %997 = vmatmul.mubr.f32.gmra.mxu0 %v717
        %v998 = vpop.f32.mrf.mxu0
        %v999 = vadd.f32 %v697, %v998
        %v1000 = vpop.f32.mrf.mxu0
        %v1001 = vadd.f32 %v701, %v1000
        %1002 = vdwg.mxu0
        %1003 = vmatprep.subr.mxu0 0.0
        %1004 = vmatpush1.msra.mxu0 0.0
        %1005 = vmatprep.subr.mxu0 0.0
        %1006 = vmatpush1.msra.mxu0 0.0
        %1007 = vmatprep.subr.mxu0 0.0
        %1008 = vmatpush1.msra.mxu0 0.0
        %1009 = vmatprep.subr.mxu0 0.0
        %1010 = vmatpush1.msra.mxu0 0.0
        %1011 = vmatprep.subr.mxu0 0.0
        %1012 = vmatpush1.msra.mxu0 0.0
        %1013 = vmatprep.subr.mxu0 0.0
        %1014 = vmatpush1.msra.mxu0 0.0
        %1015 = vmatprep.subr.mxu0 0.0
        %1016 = vmatpush1.msra.mxu0 0.0
        %1017 = vmatprep.subr.mxu0 0.0
        %1018 = vmatpush1.msra.mxu0 0.0
        %1019 = vmatprep.subr.mxu0 0.0
        %1020 = vmatpush1.msra.mxu0 0.0
        %1021 = vmatprep.subr.mxu0 0.0
        %1022 = vmatpush1.msra.mxu0 0.0
        %1023 = vmatprep.subr.mxu0 0.0
        %1024 = vmatpush1.msra.mxu0 %v665
        %1025 = vmatprep.subr.mxu0 0.0
        %1026 = vmatpush1.msra.mxu0 %v656
        %1027 = vmatprep.subr.mxu0 0.0
        %1028 = vmatpush1.msra.mxu0 %v647
        %1029 = vmatprep.subr.mxu0 0.0
        %1030 = vmatpush1.msra.mxu0 %v638
        %1031 = vmatprep.subr.mxu0 0.0
        %1032 = vmatpush1.msra.mxu0 %v629
        %1033 = vmatprep.subr.mxu0 0.0
        %1034 = vmatpush1.msra.mxu0 %v620
        %1035 = vmatprep.subr.mxu0 0.0
        %1036 = vmatpush2.msra.mxu0 0.0
        %1037 = vmatprep.subr.mxu0 0.0
        %1038 = vmatpush2.msra.mxu0 0.0
        %1039 = vmatprep.subr.mxu0 0.0
        %1040 = vmatpush2.msra.mxu0 0.0
        %1041 = vmatprep.subr.mxu0 0.0
        %1042 = vmatpush2.msra.mxu0 0.0
        %1043 = vmatprep.subr.mxu0 0.0
        %1044 = vmatpush2.msra.mxu0 0.0
        %1045 = vmatprep.subr.mxu0 0.0
        %1046 = vmatpush2.msra.mxu0 0.0
        %1047 = vmatprep.subr.mxu0 0.0
        %1048 = vmatpush2.msra.mxu0 0.0
        %1049 = vmatprep.subr.mxu0 0.0
        %1050 = vmatpush2.msra.mxu0 0.0
        %1051 = vmatprep.subr.mxu0 0.0
        %1052 = vmatpush2.msra.mxu0 0.0
        %1053 = vmatprep.subr.mxu0 0.0
        %1054 = vmatpush2.msra.mxu0 0.0
        %1055 = vmatprep.subr.mxu0 0.0
        %1056 = vmatpush2.msra.mxu0 0.0
        %1057 = vmatprep.subr.mxu0 0.0
        %1058 = vmatpush2.msra.mxu0 0.0
        %1059 = vmatprep.subr.mxu0 0.0
        %1060 = vmatpush2.msra.mxu0 0.0
        %1061 = vmatprep.subr.mxu0 0.0
        %1062 = vmatpush2.msra.mxu0 0.0
        %1063 = vmatprep.subr.mxu0 0.0
        %1064 = vmatpush2.msra.mxu0 0.0
        %1065 = vmatprep.subr.mxu0 0.0
        %1066 = vmatpush2.msra.mxu0 0.0
        %1067 = vmatprep.mubr.f32.mxu0 0.0
        %1068 = vmatmul.mubr.f32.gmra.mxu0 %v717
        %v1069 = vpop.f32.mrf.mxu0
        %v1070 = vadd.f32 %v705, %v1069
        %v1071 = vpop.f32.mrf.mxu0
        %1072 = vdwg.mxu0
        %v1073 = vld [vmem:[#allocation2] sm:$0xf]
        %v1074 = vld [vmem:[%s522] sm:$0xff]
        %v1075 = vld [vmem:[%s522 + $0x8] sm:$0xff]
        %v1076 = vld [vmem:[%s522 + $0x10] sm:$0xff]
        %v1077 = vld [vmem:[%s522 + $0x18] sm:$0xff]
        %v1078 = vld [vmem:[%s522 + $0x20] sm:$0xff]
        %v1079 = vld [vmem:[%s522 + $0x28] sm:$0xff]
        %v1080 = vld [vmem:[%s522 + $0x30] sm:$0xff]
        %v1081 = vld [vmem:[%s522 + $0x38] sm:$0xff]
        %v1082 = vld [vmem:[%s522 + $0x40] sm:$0xff]
        %v1083 = vld [vmem:[%s522 + $0x48] sm:$0xff]
        %v1084 = vld [vmem:[%s522 + $0x50] sm:$0xff]
        %v1085 = vld [vmem:[%s522 + $0x58] sm:$0xff]
        %v1086 = vld [vmem:[%s522 + $0x60] sm:$0xff]
        %v1087 = vld [vmem:[%s522 + $0x68] sm:$0xff]
        %v1088 = vld [vmem:[%s522 + $0x70] sm:$0xff]
        %v1089 = vld [vmem:[%s522 + $0x78] sm:$0xff]
        %v1090 = vld [vmem:[%s522 + $0x80] sm:$0xff]
        %v1091 = vld [vmem:[%s522 + $0x88] sm:$0xff]
        %v1092 = vld [vmem:[%s522 + $0x90] sm:$0xff]
        %v1093 = vld [vmem:[%s522 + $0x98] sm:$0xff]
        %v1094 = vld [vmem:[%s522 + $0xa0] sm:$0xff]
        %v1095 = vld [vmem:[%s522 + $0xa8] sm:$0xff]
        %v1096 = vld [vmem:[%s522 + $0xb0] sm:$0xff]
        %v1097 = vld [vmem:[%s522 + $0xb8] sm:$0xff]
        %v1098 = vld [vmem:[%s522 + $0xc0] sm:$0xff]
        %v1099 = vld [vmem:[%s522 + $0xc8] sm:$0xff]
        %v1100 = vld [vmem:[%s522 + $0xd0] sm:$0xff]
        %v1101 = vld [vmem:[%s522 + $0xd8] sm:$0xff]
        %v1102 = vld [vmem:[%s522 + $0xe0] sm:$0xff]
        %v1103 = vld [vmem:[%s522 + $0xe8] sm:$0xff]
        %v1104 = vld [vmem:[%s522 + $0xf0] sm:$0xff]
        %v1105 = vld [vmem:[%s522 + $0xf8] sm:$0xff]
        %v1106 = vld [vmem:[%s522 + $0x100] sm:$0xff]
        %v1107 = vld [vmem:[%s522 + $0x108] sm:$0xff]
        %v1108 = vld [vmem:[%s522 + $0x110] sm:$0xff]
        %v1109 = vld [vmem:[%s522 + $0x118] sm:$0xff]
        %v1110 = vld [vmem:[%s522 + $0x120] sm:$0xff]
        %v1111 = vld [vmem:[%s522 + $0x128] sm:$0xff]
        %v1112 = vld [vmem:[%s522 + $0x130] sm:$0xff]
        %v1113 = vld [vmem:[%s522 + $0x138] sm:$0xff]
        %v1114 = vld [vmem:[%s522 + $0x140] sm:$0xff]
        %v1115 = vld [vmem:[%s522 + $0x148] sm:$0xff]
        %v1116 = vld [vmem:[%s522 + $0x150] sm:$0xff]
        %v1117 = vld [vmem:[%s522 + $0x158] sm:$0xff]
        %v1118 = vld [vmem:[%s522 + $0x160] sm:$0xff]
        %v1119 = vld [vmem:[%s522 + $0x168] sm:$0xff]
        %v1120 = vld [vmem:[%s522 + $0x170] sm:$0xff]
        %v1121 = vld [vmem:[%s522 + $0x178] sm:$0xff]
        %v1122 = vld [vmem:[%s522 + $0x180] sm:$0xff]
        %v1123 = vld [vmem:[%s522 + $0x188] sm:$0xff]
        %v1124 = vld [vmem:[%s522 + $0x190] sm:$0xff]
        %v1125 = vld [vmem:[%s522 + $0x198] sm:$0xff]
        %v1126 = vld [vmem:[%s522 + $0x1a0] sm:$0xff]
        %v1127 = vld [vmem:[%s522 + $0x1a8] sm:$0xff]
        %v1128 = vld [vmem:[%s522 + $0x1b0] sm:$0xff]
        %v1129 = vld [vmem:[%s522 + $0x1b8] sm:$0xff]
        %v1130 = vld [vmem:[%s522 + $0x1c0] sm:$0xff]
        %v1131 = vld [vmem:[%s522 + $0x1c8] sm:$0xff]
        %v1132 = vld [vmem:[%s522 + $0x1d0] sm:$0xff]
        %v1133 = vld [vmem:[%s522 + $0x1d8] sm:$0xff]
        %v1134 = vld [vmem:[%s522 + $0x1e0] sm:$0xff]
        %v1135 = vld [vmem:[%s522 + $0x1e8] sm:$0xff]
        %v1136 = vld [vmem:[%s522 + $0x1f0] sm:$0xff]
        %v1137 = vld [vmem:[%s522 + $0x1f8] sm:$0xff]
        %v1138 = vld [vmem:[%s522 + $0x200] sm:$0xff]
        %v1139 = vld [vmem:[%s522 + $0x208] sm:$0xff]
        %v1140 = vld [vmem:[%s522 + $0x210] sm:$0xff]
        %v1141 = vld [vmem:[%s522 + $0x218] sm:$0xff]
        %v1142 = vld [vmem:[%s522 + $0x220] sm:$0xff]
        %v1143 = vld [vmem:[%s522 + $0x228] sm:$0xff]
        %v1144 = vld [vmem:[%s522 + $0x230] sm:$0xff]
        %v1145 = vld [vmem:[%s522 + $0x238] sm:$0xff]
        %v1146 = vld [vmem:[%s522 + $0x240] sm:$0xff]
        %v1147 = vld [vmem:[%s522 + $0x248] sm:$0xff]
        %v1148 = vld [vmem:[%s522 + $0x250] sm:$0xff]
        %v1149 = vld [vmem:[%s522 + $0x258] sm:$0xff]
        %v1150 = vld [vmem:[%s522 + $0x260] sm:$0xff]
        %v1151 = vld [vmem:[%s522 + $0x268] sm:$0xff]
        %v1152 = vld [vmem:[%s522 + $0x270] sm:$0xff]
        %v1153 = vld [vmem:[%s522 + $0x278] sm:$0xff]
        %v1154 = vld [vmem:[%s522 + $0x280] sm:$0xff]
        %v1155 = vld [vmem:[%s522 + $0x288] sm:$0xff]
        %v1156 = vld [vmem:[%s522 + $0x290] sm:$0xff]
        %v1157 = vld [vmem:[%s522 + $0x298] sm:$0xff]
        %v1158 = vld [vmem:[%s522 + $0x2a0] sm:$0xff]
        %v1159 = vld [vmem:[%s522 + $0x2a8] sm:$0xff]
        %v1160 = vld [vmem:[%s522 + $0x2b0] sm:$0xff]
        %v1161 = vld [vmem:[%s522 + $0x2b8] sm:$0xff]
        %v1162 = vld [vmem:[%s522 + $0x2c0] sm:$0xff]
        %v1163 = vld [vmem:[%s522 + $0x2c8] sm:$0xff]
        %v1164 = vld [vmem:[%s522 + $0x2d0] sm:$0xff]
        %v1165 = vld [vmem:[%s522 + $0x2d8] sm:$0xff]
        %v1166 = vld [vmem:[%s522 + $0x2e0] sm:$0xff]
        %v1167 = vld [vmem:[%s522 + $0x2e8] sm:$0xff]
        %v1168 = vld [vmem:[%s522 + $0x2f0] sm:$0xff]
        %v1169 = vld [vmem:[%s522 + $0x2f8] sm:$0xff]
        %v1170 = vld [vmem:[%s522 + $0x300] sm:$0xff]
        %v1171 = vld [vmem:[%s522 + $0x308] sm:$0xff]
        %v1172 = vld [vmem:[%s522 + $0x310] sm:$0xff]
        %v1173 = vld [vmem:[%s522 + $0x318] sm:$0xff]
        %v1174 = vld [vmem:[%s522 + $0x320] sm:$0xff]
        %v1175 = vld [vmem:[%s522 + $0x328] sm:$0xff]
        %v1176 = vld [vmem:[%s522 + $0x330] sm:$0xff]
        %v1177 = vld [vmem:[%s522 + $0x338] sm:$0xff]
        %v1178 = vld [vmem:[%s522 + $0x340] sm:$0xff]
        %v1179 = vld [vmem:[%s522 + $0x348] sm:$0xff]
        %v1180 = vld [vmem:[%s522 + $0x350] sm:$0xff]
        %v1181 = vld [vmem:[%s522 + $0x358] sm:$0xff]
        %v1182 = vld [vmem:[%s522 + $0x360] sm:$0xff]
        %v1183 = vld [vmem:[%s522 + $0x368] sm:$0xff]
        %v1184 = vld [vmem:[%s522 + $0x370] sm:$0xff]
        %v1185 = vld [vmem:[%s522 + $0x378] sm:$0xff]
        %v1186 = vld [vmem:[%s522 + $0x380] sm:$0xff]
        %v1187 = vld [vmem:[%s522 + $0x388] sm:$0xff]
        %v1188 = vld [vmem:[%s522 + $0x390] sm:$0xff]
        %v1189 = vld [vmem:[%s522 + $0x398] sm:$0xff]
        %v1190 = vld [vmem:[%s522 + $0x3a0] sm:$0xff]
        %v1191 = vld [vmem:[%s522 + $0x3a8] sm:$0xff]
        %v1192 = vld [vmem:[%s522 + $0x3b0] sm:$0xff]
        %v1193 = vld [vmem:[%s522 + $0x3b8] sm:$0xff]
        %v1194 = vld [vmem:[%s522 + $0x3c0] sm:$0xff]
        %v1195 = vld [vmem:[%s522 + $0x3c8] sm:$0xff]
        %v1196 = vld [vmem:[%s522 + $0x3d0] sm:$0xff]
        %v1197 = vld [vmem:[%s522 + $0x3d8] sm:$0xff]
        %v1198 = vld [vmem:[%s522 + $0x3e0] sm:$0xff]
        %v1199 = vld [vmem:[%s522 + $0x3e8] sm:$0xff]
        %v1200 = vld [vmem:[%s522 + $0x3f0] sm:$0xff]
        %v1201 = vld [vmem:[%s522 + $0x3f8] sm:$0xff]
        %v1202 = vld [vmem:[%s522 + $0x400] sm:$0xff]
        %v1203 = vld [vmem:[%s522 + $0x408] sm:$0xff]
        %v1204 = vld [vmem:[%s522 + $0x410] sm:$0xff]
        %v1205 = vld [vmem:[%s522 + $0x418] sm:$0xff]
        %v1206 = vld [vmem:[%s522 + $0x420] sm:$0xff]
        %v1207 = vld [vmem:[%s522 + $0x428] sm:$0xff]
        %v1208 = vld [vmem:[%s522 + $0x430] sm:$0xff]
        %v1209 = vld [vmem:[%s522 + $0x438] sm:$0xff]
        %v1210 = vld [vmem:[%s522 + $0x440] sm:$0xff]
        %v1211 = vld [vmem:[%s522 + $0x448] sm:$0xff]
        %v1212 = vld [vmem:[%s522 + $0x450] sm:$0xff]
        %v1213 = vld [vmem:[%s522 + $0x458] sm:$0xff]
        %v1214 = vld [vmem:[%s522 + $0x460] sm:$0xff]
        %v1215 = vld [vmem:[%s522 + $0x468] sm:$0xff]
        %v1216 = vld [vmem:[%s522 + $0x470] sm:$0xff]
        %v1217 = vld [vmem:[%s522 + $0x478] sm:$0xff]
        %v1218 = vld [vmem:[%s522 + $0x480] sm:$0xff]
        %v1219 = vld [vmem:[%s522 + $0x488] sm:$0xff]
        %v1220 = vld [vmem:[%s522 + $0x490] sm:$0xff]
        %v1221 = vld [vmem:[%s522 + $0x498] sm:$0xff]
        %v1222 = vld [vmem:[%s522 + $0x4a0] sm:$0xff]
        %v1223 = vld [vmem:[%s522 + $0x4a8] sm:$0xff]
        %v1224 = vld [vmem:[%s522 + $0x4b0] sm:$0xff]
        %v1225 = vld [vmem:[%s522 + $0x4b8] sm:$0xff]
        %v1226 = vld [vmem:[%s522 + $0x4c0] sm:$0xff]
        %v1227 = vld [vmem:[%s522 + $0x4c8] sm:$0xff]
        %v1228 = vld [vmem:[%s522 + $0x4d0] sm:$0xff]
        %v1229 = vld [vmem:[%s522 + $0x4d8] sm:$0xff]
        %v1230 = vld [vmem:[%s522 + $0x4e0] sm:$0xff]
        %v1231 = vld [vmem:[%s522 + $0x4e8] sm:$0xff]
        %v1232 = vld [vmem:[%s522 + $0x4f0] sm:$0xff]
        %v1233 = vld [vmem:[%s522 + $0x4f8] sm:$0xff]
        %v1234 = vld [vmem:[%s522 + $0x500] sm:$0xff]
        %v1235 = vld [vmem:[%s522 + $0x508] sm:$0xff]
        %v1236 = vld [vmem:[%s522 + $0x510] sm:$0xff]
        %v1237 = vld [vmem:[%s522 + $0x518] sm:$0xff]
        %v1238 = vld [vmem:[%s522 + $0x520] sm:$0xff]
        %v1239 = vld [vmem:[%s522 + $0x528] sm:$0xff]
        %v1240 = vld [vmem:[%s522 + $0x530] sm:$0xff]
        %v1241 = vld [vmem:[%s522 + $0x538] sm:$0xff]
        %v1242 = vld [vmem:[%s522 + $0x540] sm:$0xff]
        %v1243 = vld [vmem:[%s522 + $0x548] sm:$0xff]
        %v1244 = vld [vmem:[%s522 + $0x550] sm:$0xff]
        %v1245 = vld [vmem:[%s522 + $0x558] sm:$0xff]
        %v1246 = vld [vmem:[%s522 + $0x560] sm:$0xff]
        %v1247 = vld [vmem:[%s522 + $0x568] sm:$0xff]
        %v1248 = vld [vmem:[%s522 + $0x570] sm:$0xff]
        %v1249 = vld [vmem:[%s522 + $0x578] sm:$0xff]
        %v1250 = vld [vmem:[%s522 + $0x580] sm:$0xff]
        %v1251 = vld [vmem:[%s522 + $0x588] sm:$0xff]
        %v1252 = vld [vmem:[%s522 + $0x590] sm:$0xff]
        %v1253 = vld [vmem:[%s522 + $0x598] sm:$0xff]
        %v1254 = vld [vmem:[%s522 + $0x5a0] sm:$0xff]
        %v1255 = vld [vmem:[%s522 + $0x5a8] sm:$0xff]
        %v1256 = vld [vmem:[%s522 + $0x5b0] sm:$0xff]
        %v1257 = vld [vmem:[%s522 + $0x5b8] sm:$0xff]
        %v1258 = vld [vmem:[%s522 + $0x5c0] sm:$0xff]
        %v1259 = vld [vmem:[%s522 + $0x5c8] sm:$0xff]
        %v1260 = vld [vmem:[%s522 + $0x5d0] sm:$0xff]
        %v1261 = vld [vmem:[%s522 + $0x5d8] sm:$0xff]
        %v1262 = vld [vmem:[%s522 + $0x5e0] sm:$0xff]
        %v1263 = vld [vmem:[%s522 + $0x5e8] sm:$0xff]
        %v1264 = vld [vmem:[%s522 + $0x5f0] sm:$0xff]
        %v1265 = vld [vmem:[%s522 + $0x5f8] sm:$0xff]
        %v1266 = vld [vmem:[%s522 + $0x600] sm:$0xff]
        %v1267 = vld [vmem:[%s522 + $0x608] sm:$0xff]
        %v1268 = vld [vmem:[%s522 + $0x610] sm:$0xff]
        %v1269 = vld [vmem:[%s522 + $0x618] sm:$0xff]
        %v1270 = vld [vmem:[%s522 + $0x620] sm:$0xff]
        %v1271 = vld [vmem:[%s522 + $0x628] sm:$0xff]
        %v1272 = vld [vmem:[%s522 + $0x630] sm:$0xff]
        %v1273 = vld [vmem:[%s522 + $0x638] sm:$0xff]
        %v1274 = vld [vmem:[%s522 + $0x640] sm:$0xff]
        %v1275 = vld [vmem:[%s522 + $0x648] sm:$0xff]
        %v1276 = vld [vmem:[%s522 + $0x650] sm:$0xff]
        %v1277 = vld [vmem:[%s522 + $0x658] sm:$0xff]
        %v1278 = vld [vmem:[%s522 + $0x660] sm:$0xff]
        %v1279 = vld [vmem:[%s522 + $0x668] sm:$0xff]
        %v1280 = vld [vmem:[%s522 + $0x670] sm:$0xff]
        %v1281 = vld [vmem:[%s522 + $0x678] sm:$0xff]
        %v1282 = vld [vmem:[%s522 + $0x680] sm:$0xff]
        %v1283 = vld [vmem:[%s522 + $0x688] sm:$0xff]
        %v1284 = vld [vmem:[%s522 + $0x690] sm:$0xff]
        %v1285 = vld [vmem:[%s522 + $0x698] sm:$0xff]
        %v1286 = vld [vmem:[%s522 + $0x6a0] sm:$0xff]
        %v1287 = vld [vmem:[%s522 + $0x6a8] sm:$0xff]
        %v1288 = vld [vmem:[%s522 + $0x6b0] sm:$0xff]
        %v1289 = vld [vmem:[%s522 + $0x6b8] sm:$0xff]
        %v1290 = vld [vmem:[%s522 + $0x6c0] sm:$0xff]
        %v1291 = vld [vmem:[%s522 + $0x6c8] sm:$0xff]
        %v1292 = vld [vmem:[%s522 + $0x6d0] sm:$0xff]
        %v1293 = vld [vmem:[%s522 + $0x6d8] sm:$0xff]
        %v1294 = vld [vmem:[%s522 + $0x6e0] sm:$0xff]
        %v1295 = vld [vmem:[%s522 + $0x6e8] sm:$0xff]
        %v1296 = vld [vmem:[%s522 + $0x6f0] sm:$0xff]
        %v1297 = vld [vmem:[%s522 + $0x6f8] sm:$0xff]
        %v1298 = vld [vmem:[%s522 + $0x700] sm:$0xff]
        %v1299 = vld [vmem:[%s522 + $0x708] sm:$0xff]
        %v1300 = vld [vmem:[%s522 + $0x710] sm:$0xff]
        %v1301 = vld [vmem:[%s522 + $0x718] sm:$0xff]
        %v1302 = vld [vmem:[%s522 + $0x720] sm:$0xff]
        %v1303 = vld [vmem:[%s522 + $0x728] sm:$0xff]
        %v1304 = vld [vmem:[%s522 + $0x730] sm:$0xff]
        %v1305 = vld [vmem:[%s522 + $0x738] sm:$0xff]
        %v1306 = vld [vmem:[%s522 + $0x740] sm:$0xff]
        %v1307 = vld [vmem:[%s522 + $0x748] sm:$0xff]
        %v1308 = vld [vmem:[%s522 + $0x750] sm:$0xff]
        %v1309 = vld [vmem:[%s522 + $0x758] sm:$0xff]
        %v1310 = vld [vmem:[%s522 + $0x760] sm:$0xff]
        %v1311 = vld [vmem:[%s522 + $0x768] sm:$0xff]
        %v1312 = vld [vmem:[%s522 + $0x770] sm:$0xff]
        %v1313 = vld [vmem:[%s522 + $0x778] sm:$0xff]
        %v1314 = vld [vmem:[%s522 + $0x780] sm:$0xff]
        %v1315 = vld [vmem:[%s522 + $0x788] sm:$0xff]
        %v1316 = vld [vmem:[%s522 + $0x790] sm:$0xff]
        %v1317 = vld [vmem:[%s522 + $0x798] sm:$0xff]
        %v1318 = vld [vmem:[%s522 + $0x7a0] sm:$0xff]
        %v1319 = vld [vmem:[%s522 + $0x7a8] sm:$0xff]
        %v1320 = vld [vmem:[%s522 + $0x7b0] sm:$0xff]
        %v1321 = vld [vmem:[%s522 + $0x7b8] sm:$0xff]
        %v1322 = vld [vmem:[%s522 + $0x7c0] sm:$0xff]
        %v1323 = vld [vmem:[%s522 + $0x7c8] sm:$0xff]
        %v1324 = vld [vmem:[%s522 + $0x7d0] sm:$0xff]
        %v1325 = vld [vmem:[%s522 + $0x7d8] sm:$0xff]
        %v1326 = vld [vmem:[%s522 + $0x7e0] sm:$0xff]
        %v1327 = vld [vmem:[%s522 + $0x7e8] sm:$0xff]
        %v1328 = vld [vmem:[%s522 + $0x7f0] sm:$0xff]
        %v1329 = vld [vmem:[%s522 + $0x7f8] sm:$0xff]
        %v1330 = vld [vmem:[%s522 + $0x800] sm:$0xff]
        %v1331 = vld [vmem:[%s522 + $0x808] sm:$0xff]
        %v1332 = vld [vmem:[%s522 + $0x810] sm:$0xff]
        %v1333 = vld [vmem:[%s522 + $0x818] sm:$0xff]
        %v1334 = vld [vmem:[%s522 + $0x820] sm:$0xff]
        %v1335 = vld [vmem:[%s522 + $0x828] sm:$0xff]
        %v1336 = vld [vmem:[%s522 + $0x830] sm:$0xff]
        %v1337 = vld [vmem:[%s522 + $0x838] sm:$0xff]
        %vm1338 = vcmask 261120
        %v1340 = vsel %vm1338, %v1070, 0
        %1342 = vmatprep.subr.mxu0 %v1105
        %1343 = vmatpush1.msra.mxu0 %v1104
        %1344 = vmatprep.subr.mxu0 %v1103
        %1345 = vmatpush1.msra.mxu0 %v1102
        %1346 = vmatprep.subr.mxu0 %v1101
        %1347 = vmatpush1.msra.mxu0 %v1100
        %1348 = vmatprep.subr.mxu0 %v1099
        %1349 = vmatpush1.msra.mxu0 %v1098
        %1350 = vmatprep.subr.mxu0 %v1097
        %1351 = vmatpush1.msra.mxu0 %v1096
        %1352 = vmatprep.subr.mxu0 %v1095
        %1353 = vmatpush1.msra.mxu0 %v1094
        %1354 = vmatprep.subr.mxu0 %v1093
        %1355 = vmatpush1.msra.mxu0 %v1092
        %1356 = vmatprep.subr.mxu0 %v1091
        %1357 = vmatpush1.msra.mxu0 %v1090
        %1358 = vmatprep.subr.mxu0 %v1089
        %1359 = vmatpush1.msra.mxu0 %v1088
        %1360 = vmatprep.subr.mxu0 %v1087
        %1361 = vmatpush1.msra.mxu0 %v1086
        %1362 = vmatprep.subr.mxu0 %v1085
        %1363 = vmatpush1.msra.mxu0 %v1084
        %1364 = vmatprep.subr.mxu0 %v1083
        %1365 = vmatpush1.msra.mxu0 %v1082
        %1366 = vmatprep.subr.mxu0 %v1081
        %1367 = vmatpush1.msra.mxu0 %v1080
        %1368 = vmatprep.subr.mxu0 %v1079
        %1369 = vmatpush1.msra.mxu0 %v1078
        %1370 = vmatprep.subr.mxu0 %v1077
        %1371 = vmatpush1.msra.mxu0 %v1076
        %1372 = vmatprep.subr.mxu0 %v1075
        %1373 = vmatpush1.msra.mxu0 %v1074
        %1374 = vmatprep.subr.mxu0 %v1137
        %1375 = vmatpush2.msra.mxu0 %v1136
        %1376 = vmatprep.subr.mxu0 %v1135
        %1377 = vmatpush2.msra.mxu0 %v1134
        %1378 = vmatprep.subr.mxu0 %v1133
        %1379 = vmatpush2.msra.mxu0 %v1132
        %1380 = vmatprep.subr.mxu0 %v1131
        %1381 = vmatpush2.msra.mxu0 %v1130
        %1382 = vmatprep.subr.mxu0 %v1129
        %1383 = vmatpush2.msra.mxu0 %v1128
        %1384 = vmatprep.subr.mxu0 %v1127
        %1385 = vmatpush2.msra.mxu0 %v1126
        %1386 = vmatprep.subr.mxu0 %v1125
        %1387 = vmatpush2.msra.mxu0 %v1124
        %1388 = vmatprep.subr.mxu0 %v1123
        %1389 = vmatpush2.msra.mxu0 %v1122
        %1390 = vmatprep.subr.mxu0 %v1121
        %1391 = vmatpush2.msra.mxu0 %v1120
        %1392 = vmatprep.subr.mxu0 %v1119
        %1393 = vmatpush2.msra.mxu0 %v1118
        %1394 = vmatprep.subr.mxu0 %v1117
        %1395 = vmatpush2.msra.mxu0 %v1116
        %1396 = vmatprep.subr.mxu0 %v1115
        %1397 = vmatpush2.msra.mxu0 %v1114
        %1398 = vmatprep.subr.mxu0 %v1113
        %1399 = vmatpush2.msra.mxu0 %v1112
        %1400 = vmatprep.subr.mxu0 %v1111
        %1401 = vmatpush2.msra.mxu0 %v1110
        %1402 = vmatprep.subr.mxu0 %v1109
        %1403 = vmatpush2.msra.mxu0 %v1108
        %1404 = vmatprep.subr.mxu0 %v1107
        %1405 = vmatpush2.msra.mxu0 %v1106
        %1406 = vmatprep.mubr.f32.mxu0 %v788
        %1407 = vmatmul.mubr.f32.gmra.mxu0 %v786
        %v1408 = vpop.f32.mrf.mxu0
        %v1409 = vadd.f32 0.0, %v1408
        %v1410 = vpop.f32.mrf.mxu0
        %v1411 = vadd.f32 0.0, %v1410
        %1412 = vdwg.mxu0
        %1413 = vmatprep.subr.mxu0 %v1169
        %1414 = vmatpush1.msra.mxu0 %v1168
        %1415 = vmatprep.subr.mxu0 %v1167
        %1416 = vmatpush1.msra.mxu0 %v1166
        %1417 = vmatprep.subr.mxu0 %v1165
        %1418 = vmatpush1.msra.mxu0 %v1164
        %1419 = vmatprep.subr.mxu0 %v1163
        %1420 = vmatpush1.msra.mxu0 %v1162
        %1421 = vmatprep.subr.mxu0 %v1161
        %1422 = vmatpush1.msra.mxu0 %v1160
        %1423 = vmatprep.subr.mxu0 %v1159
        %1424 = vmatpush1.msra.mxu0 %v1158
        %1425 = vmatprep.subr.mxu0 %v1157
        %1426 = vmatpush1.msra.mxu0 %v1156
        %1427 = vmatprep.subr.mxu0 %v1155
        %1428 = vmatpush1.msra.mxu0 %v1154
        %1429 = vmatprep.subr.mxu0 %v1153
        %1430 = vmatpush1.msra.mxu0 %v1152
        %1431 = vmatprep.subr.mxu0 %v1151
        %1432 = vmatpush1.msra.mxu0 %v1150
        %1433 = vmatprep.subr.mxu0 %v1149
        %1434 = vmatpush1.msra.mxu0 %v1148
        %1435 = vmatprep.subr.mxu0 %v1147
        %1436 = vmatpush1.msra.mxu0 %v1146
        %1437 = vmatprep.subr.mxu0 %v1145
        %1438 = vmatpush1.msra.mxu0 %v1144
        %1439 = vmatprep.subr.mxu0 %v1143
        %1440 = vmatpush1.msra.mxu0 %v1142
        %1441 = vmatprep.subr.mxu0 %v1141
        %1442 = vmatpush1.msra.mxu0 %v1140
        %1443 = vmatprep.subr.mxu0 %v1139
        %1444 = vmatpush1.msra.mxu0 %v1138
        %1445 = vmatprep.subr.mxu0 %v1201
        %1446 = vmatpush2.msra.mxu0 %v1200
        %1447 = vmatprep.subr.mxu0 %v1199
        %1448 = vmatpush2.msra.mxu0 %v1198
        %1449 = vmatprep.subr.mxu0 %v1197
        %1450 = vmatpush2.msra.mxu0 %v1196
        %1451 = vmatprep.subr.mxu0 %v1195
        %1452 = vmatpush2.msra.mxu0 %v1194
        %1453 = vmatprep.subr.mxu0 %v1193
        %1454 = vmatpush2.msra.mxu0 %v1192
        %1455 = vmatprep.subr.mxu0 %v1191
        %1456 = vmatpush2.msra.mxu0 %v1190
        %1457 = vmatprep.subr.mxu0 %v1189
        %1458 = vmatpush2.msra.mxu0 %v1188
        %1459 = vmatprep.subr.mxu0 %v1187
        %1460 = vmatpush2.msra.mxu0 %v1186
        %1461 = vmatprep.subr.mxu0 %v1185
        %1462 = vmatpush2.msra.mxu0 %v1184
        %1463 = vmatprep.subr.mxu0 %v1183
        %1464 = vmatpush2.msra.mxu0 %v1182
        %1465 = vmatprep.subr.mxu0 %v1181
        %1466 = vmatpush2.msra.mxu0 %v1180
        %1467 = vmatprep.subr.mxu0 %v1179
        %1468 = vmatpush2.msra.mxu0 %v1178
        %1469 = vmatprep.subr.mxu0 %v1177
        %1470 = vmatpush2.msra.mxu0 %v1176
        %1471 = vmatprep.subr.mxu0 %v1175
        %1472 = vmatpush2.msra.mxu0 %v1174
        %1473 = vmatprep.subr.mxu0 %v1173
        %1474 = vmatpush2.msra.mxu0 %v1172
        %1475 = vmatprep.subr.mxu0 %v1171
        %1476 = vmatpush2.msra.mxu0 %v1170
        %1477 = vmatprep.mubr.f32.mxu0 %v859
        %1478 = vmatmul.mubr.f32.gmra.mxu0 %v857
        %v1479 = vpop.f32.mrf.mxu0
        %v1480 = vadd.f32 %v1409, %v1479
        %v1481 = vpop.f32.mrf.mxu0
        %v1482 = vadd.f32 %v1411, %v1481
        %1483 = vdwg.mxu0
        %1484 = vmatprep.subr.mxu0 %v1233
        %1485 = vmatpush1.msra.mxu0 %v1232
        %1486 = vmatprep.subr.mxu0 %v1231
        %1487 = vmatpush1.msra.mxu0 %v1230
        %1488 = vmatprep.subr.mxu0 %v1229
        %1489 = vmatpush1.msra.mxu0 %v1228
        %1490 = vmatprep.subr.mxu0 %v1227
        %1491 = vmatpush1.msra.mxu0 %v1226
        %1492 = vmatprep.subr.mxu0 %v1225
        %1493 = vmatpush1.msra.mxu0 %v1224
        %1494 = vmatprep.subr.mxu0 %v1223
        %1495 = vmatpush1.msra.mxu0 %v1222
        %1496 = vmatprep.subr.mxu0 %v1221
        %1497 = vmatpush1.msra.mxu0 %v1220
        %1498 = vmatprep.subr.mxu0 %v1219
        %1499 = vmatpush1.msra.mxu0 %v1218
        %1500 = vmatprep.subr.mxu0 %v1217
        %1501 = vmatpush1.msra.mxu0 %v1216
        %1502 = vmatprep.subr.mxu0 %v1215
        %1503 = vmatpush1.msra.mxu0 %v1214
        %1504 = vmatprep.subr.mxu0 %v1213
        %1505 = vmatpush1.msra.mxu0 %v1212
        %1506 = vmatprep.subr.mxu0 %v1211
        %1507 = vmatpush1.msra.mxu0 %v1210
        %1508 = vmatprep.subr.mxu0 %v1209
        %1509 = vmatpush1.msra.mxu0 %v1208
        %1510 = vmatprep.subr.mxu0 %v1207
        %1511 = vmatpush1.msra.mxu0 %v1206
        %1512 = vmatprep.subr.mxu0 %v1205
        %1513 = vmatpush1.msra.mxu0 %v1204
        %1514 = vmatprep.subr.mxu0 %v1203
        %1515 = vmatpush1.msra.mxu0 %v1202
        %1516 = vmatprep.subr.mxu0 %v1265
        %1517 = vmatpush2.msra.mxu0 %v1264
        %1518 = vmatprep.subr.mxu0 %v1263
        %1519 = vmatpush2.msra.mxu0 %v1262
        %1520 = vmatprep.subr.mxu0 %v1261
        %1521 = vmatpush2.msra.mxu0 %v1260
        %1522 = vmatprep.subr.mxu0 %v1259
        %1523 = vmatpush2.msra.mxu0 %v1258
        %1524 = vmatprep.subr.mxu0 %v1257
        %1525 = vmatpush2.msra.mxu0 %v1256
        %1526 = vmatprep.subr.mxu0 %v1255
        %1527 = vmatpush2.msra.mxu0 %v1254
        %1528 = vmatprep.subr.mxu0 %v1253
        %1529 = vmatpush2.msra.mxu0 %v1252
        %1530 = vmatprep.subr.mxu0 %v1251
        %1531 = vmatpush2.msra.mxu0 %v1250
        %1532 = vmatprep.subr.mxu0 %v1249
        %1533 = vmatpush2.msra.mxu0 %v1248
        %1534 = vmatprep.subr.mxu0 %v1247
        %1535 = vmatpush2.msra.mxu0 %v1246
        %1536 = vmatprep.subr.mxu0 %v1245
        %1537 = vmatpush2.msra.mxu0 %v1244
        %1538 = vmatprep.subr.mxu0 %v1243
        %1539 = vmatpush2.msra.mxu0 %v1242
        %1540 = vmatprep.subr.mxu0 %v1241
        %1541 = vmatpush2.msra.mxu0 %v1240
        %1542 = vmatprep.subr.mxu0 %v1239
        %1543 = vmatpush2.msra.mxu0 %v1238
        %1544 = vmatprep.subr.mxu0 %v1237
        %1545 = vmatpush2.msra.mxu0 %v1236
        %1546 = vmatprep.subr.mxu0 %v1235
        %1547 = vmatpush2.msra.mxu0 %v1234
        %1548 = vmatprep.mubr.f32.mxu0 %v930
        %1549 = vmatmul.mubr.f32.gmra.mxu0 %v928
        %v1550 = vpop.f32.mrf.mxu0
        %v1551 = vadd.f32 %v1480, %v1550
        %v1552 = vpop.f32.mrf.mxu0
        %v1553 = vadd.f32 %v1482, %v1552
        %1554 = vdwg.mxu0
        %1555 = vmatprep.subr.mxu0 %v1297
        %1556 = vmatpush1.msra.mxu0 %v1296
        %1557 = vmatprep.subr.mxu0 %v1295
        %1558 = vmatpush1.msra.mxu0 %v1294
        %1559 = vmatprep.subr.mxu0 %v1293
        %1560 = vmatpush1.msra.mxu0 %v1292
        %1561 = vmatprep.subr.mxu0 %v1291
        %1562 = vmatpush1.msra.mxu0 %v1290
        %1563 = vmatprep.subr.mxu0 %v1289
        %1564 = vmatpush1.msra.mxu0 %v1288
        %1565 = vmatprep.subr.mxu0 %v1287
        %1566 = vmatpush1.msra.mxu0 %v1286
        %1567 = vmatprep.subr.mxu0 %v1285
        %1568 = vmatpush1.msra.mxu0 %v1284
        %1569 = vmatprep.subr.mxu0 %v1283
        %1570 = vmatpush1.msra.mxu0 %v1282
        %1571 = vmatprep.subr.mxu0 %v1281
        %1572 = vmatpush1.msra.mxu0 %v1280
        %1573 = vmatprep.subr.mxu0 %v1279
        %1574 = vmatpush1.msra.mxu0 %v1278
        %1575 = vmatprep.subr.mxu0 %v1277
        %1576 = vmatpush1.msra.mxu0 %v1276
        %1577 = vmatprep.subr.mxu0 %v1275
        %1578 = vmatpush1.msra.mxu0 %v1274
        %1579 = vmatprep.subr.mxu0 %v1273
        %1580 = vmatpush1.msra.mxu0 %v1272
        %1581 = vmatprep.subr.mxu0 %v1271
        %1582 = vmatpush1.msra.mxu0 %v1270
        %1583 = vmatprep.subr.mxu0 %v1269
        %1584 = vmatpush1.msra.mxu0 %v1268
        %1585 = vmatprep.subr.mxu0 %v1267
        %1586 = vmatpush1.msra.mxu0 %v1266
        %1587 = vmatprep.subr.mxu0 %v1329
        %1588 = vmatpush2.msra.mxu0 %v1328
        %1589 = vmatprep.subr.mxu0 %v1327
        %1590 = vmatpush2.msra.mxu0 %v1326
        %1591 = vmatprep.subr.mxu0 %v1325
        %1592 = vmatpush2.msra.mxu0 %v1324
        %1593 = vmatprep.subr.mxu0 %v1323
        %1594 = vmatpush2.msra.mxu0 %v1322
        %1595 = vmatprep.subr.mxu0 %v1321
        %1596 = vmatpush2.msra.mxu0 %v1320
        %1597 = vmatprep.subr.mxu0 %v1319
        %1598 = vmatpush2.msra.mxu0 %v1318
        %1599 = vmatprep.subr.mxu0 %v1317
        %1600 = vmatpush2.msra.mxu0 %v1316
        %1601 = vmatprep.subr.mxu0 %v1315
        %1602 = vmatpush2.msra.mxu0 %v1314
        %1603 = vmatprep.subr.mxu0 %v1313
        %1604 = vmatpush2.msra.mxu0 %v1312
        %1605 = vmatprep.subr.mxu0 %v1311
        %1606 = vmatpush2.msra.mxu0 %v1310
        %1607 = vmatprep.subr.mxu0 %v1309
        %1608 = vmatpush2.msra.mxu0 %v1308
        %1609 = vmatprep.subr.mxu0 %v1307
        %1610 = vmatpush2.msra.mxu0 %v1306
        %1611 = vmatprep.subr.mxu0 %v1305
        %1612 = vmatpush2.msra.mxu0 %v1304
        %1613 = vmatprep.subr.mxu0 %v1303
        %1614 = vmatpush2.msra.mxu0 %v1302
        %1615 = vmatprep.subr.mxu0 %v1301
        %1616 = vmatpush2.msra.mxu0 %v1300
        %1617 = vmatprep.subr.mxu0 %v1299
        %1618 = vmatpush2.msra.mxu0 %v1298
        %1619 = vmatprep.mubr.f32.mxu0 %v1001
        %1620 = vmatmul.mubr.f32.gmra.mxu0 %v999
        %v1621 = vpop.f32.mrf.mxu0
        %v1622 = vadd.f32 %v1551, %v1621
        %v1623 = vpop.f32.mrf.mxu0
        %v1624 = vadd.f32 %v1553, %v1623
        %1625 = vdwg.mxu0
        %1626 = vmatprep.subr.mxu0 0.0
        %1627 = vmatpush1.msra.mxu0 0.0
        %1628 = vmatprep.subr.mxu0 0.0
        %1629 = vmatpush1.msra.mxu0 0.0
        %1630 = vmatprep.subr.mxu0 0.0
        %1631 = vmatpush1.msra.mxu0 0.0
        %1632 = vmatprep.subr.mxu0 0.0
        %1633 = vmatpush1.msra.mxu0 0.0
        %1634 = vmatprep.subr.mxu0 0.0
        %1635 = vmatpush1.msra.mxu0 0.0
        %1636 = vmatprep.subr.mxu0 0.0
        %1637 = vmatpush1.msra.mxu0 0.0
        %1638 = vmatprep.subr.mxu0 0.0
        %1639 = vmatpush1.msra.mxu0 0.0
        %1640 = vmatprep.subr.mxu0 0.0
        %1641 = vmatpush1.msra.mxu0 0.0
        %1642 = vmatprep.subr.mxu0 0.0
        %1643 = vmatpush1.msra.mxu0 0.0
        %1644 = vmatprep.subr.mxu0 0.0
        %1645 = vmatpush1.msra.mxu0 0.0
        %1646 = vmatprep.subr.mxu0 0.0
        %1647 = vmatpush1.msra.mxu0 0.0
        %1648 = vmatprep.subr.mxu0 0.0
        %1649 = vmatpush1.msra.mxu0 0.0
        %1650 = vmatprep.subr.mxu0 %v1337
        %1651 = vmatpush1.msra.mxu0 %v1336
        %1652 = vmatprep.subr.mxu0 %v1335
        %1653 = vmatpush1.msra.mxu0 %v1334
        %1654 = vmatprep.subr.mxu0 %v1333
        %1655 = vmatpush1.msra.mxu0 %v1332
        %1656 = vmatprep.subr.mxu0 %v1331
        %1657 = vmatpush1.msra.mxu0 %v1330
        %1658 = vmatprep.subr.mxu0 0.0
        %1659 = vmatpush2.msra.mxu0 0.0
        %1660 = vmatprep.subr.mxu0 0.0
        %1661 = vmatpush2.msra.mxu0 0.0
        %1662 = vmatprep.subr.mxu0 0.0
        %1663 = vmatpush2.msra.mxu0 0.0
        %1664 = vmatprep.subr.mxu0 0.0
        %1665 = vmatpush2.msra.mxu0 0.0
        %1666 = vmatprep.subr.mxu0 0.0
        %1667 = vmatpush2.msra.mxu0 0.0
        %1668 = vmatprep.subr.mxu0 0.0
        %1669 = vmatpush2.msra.mxu0 0.0
        %1670 = vmatprep.subr.mxu0 0.0
        %1671 = vmatpush2.msra.mxu0 0.0
        %1672 = vmatprep.subr.mxu0 0.0
        %1673 = vmatpush2.msra.mxu0 0.0
        %1674 = vmatprep.subr.mxu0 0.0
        %1675 = vmatpush2.msra.mxu0 0.0
        %1676 = vmatprep.subr.mxu0 0.0
        %1677 = vmatpush2.msra.mxu0 0.0
        %1678 = vmatprep.subr.mxu0 0.0
        %1679 = vmatpush2.msra.mxu0 0.0
        %1680 = vmatprep.subr.mxu0 0.0
        %1681 = vmatpush2.msra.mxu0 0.0
        %1682 = vmatprep.subr.mxu0 0.0
        %1683 = vmatpush2.msra.mxu0 0.0
        %1684 = vmatprep.subr.mxu0 0.0
        %1685 = vmatpush2.msra.mxu0 0.0
        %1686 = vmatprep.subr.mxu0 0.0
        %1687 = vmatpush2.msra.mxu0 0.0
        %1688 = vmatprep.subr.mxu0 0.0
        %1689 = vmatpush2.msra.mxu0 0.0
        %1690 = vmatprep.mubr.f32.mxu0 0.0
        %1691 = vmatmul.mubr.f32.gmra.mxu0 %v1340
        %v1692 = vpop.f32.mrf.mxu0
        %v1693 = vadd.f32 %v1622, %v1692
        %v1694 = vpop.f32.mrf.mxu0
        %v1695 = vadd.f32 %v1624, %v1694
        %1696 = vdwg.mxu0
        %v1699 = vcombine.low %v1693, %v1695
        %v1701 = vunpack.c.l.s4 1983009808
        %v1702 = vunpack.c.0.s8 %v1701
        %v1703 = vlaneseq
        %v1704 = vshrl.u32 %v1703, 7
        %v1705 = vsub.s32 %v1702, %v1704
        %v1706 = vrot.slane %v1699, %v1705
        %v1708 = vadd.f32 %v1073, %v1706
        %1709 = vst [vmem:[#allocation2] sm:$0xf] %v1708
        %p1710 = scmp.eq.s32.totalorder %s34, 8
        // Predicated region
        $region121: #{nasnet_wrapper_forward.1} parent=75 // pred_check
          %p1711 = pneg %p1710
        $region122: #{nasnet_wrapper_forward.1} parent=75 // pred_check_branch
          %1713 = sbr.rel (%p1711) target = $region124
        $region123: #{nasnet_wrapper_forward.1} parent=75 // pred_region
          %v1714 = vld [vmem:[#allocation2] sm:$0xf]
          %v1715 = vld [vmem:[#allocation9] sm:$0x3]
          %v1717 = vlaneseq
          %v1718 = vshrl.u32 %v1717, 7
          %v1719 = vsub.s32 0, %v1718
          %v1720 = vrot.slane %v1715, %v1719
          %v1721 = vlaneseq
          %v1722 = vshrl.u32 %v1721, 7
          %v1723 = vsub.s32 1, %v1722
          %v1724 = vrot.slane %v1715, %v1723
          %v1725 = vcombine.low %v1720, %v1724
          %v1727 = vunpack.c.l.s4 1983009808
          %v1728 = vunpack.c.0.s8 %v1727
          %v1729 = vlaneseq
          %v1730 = vshrl.u32 %v1729, 7
          %v1731 = vsub.s32 %v1728, %v1730
          %v1732 = vrot.slane %v1725, %v1731
          %v1734 = vadd.f32 %v1714, %v1732
          %v1737 = vunpack.c.l.s4 1983009808
          %v1738 = vunpack.c.0.s8 %v1737
          %v1739 = vlaneseq
          %v1740 = vshrl.u32 %v1739, 7
          %v1741 = vsub.s32 %v1738, %v1740
          %v1742 = vrot.slane %v1734, %v1741
          %v1743 = vcombine.high %v1742, %v1742
          %vm1746 = vcmask 1041408
          %v1747 = vsel %vm1746, %v1742, 0.0
          %v1748 = vrot.slane %v1747, 4
          %v1749 = vadd.f32 %v1747, %v1748
          %v1750 = vrot.slane %v1749, 2
          %v1751 = vadd.f32 %v1749, %v1750
          %v1752 = vrot.slane %v1751, 1
          %v1753 = vadd.f32 %v1751, %v1752
          %v1754 = vsel %vm1746, %v1743, 0.0
          %v1755 = vrot.slane %v1754, 4
          %v1756 = vadd.f32 %v1754, %v1755
          %v1757 = vrot.slane %v1756, 2
          %v1758 = vadd.f32 %v1756, %v1757
          %v1759 = vrot.slane %v1758, 1
          %v1760 = vadd.f32 %v1758, %v1759
          %v1761 = vrcp.pop 2.0
          %v1762 = vmul.f32 %v1753, %v1761
          %v1763 = vmul.f32 %v1760, %v1761
          %v1766 = vcombine.low %v1762, %v1763
          %v1768 = vunpack.c.l.s4 1983009808
          %v1769 = vunpack.c.0.s8 %v1768
          %v1770 = vlaneseq
          %v1771 = vshrl.u32 %v1770, 7
          %v1772 = vsub.s32 %v1769, %v1771
          %v1773 = vrot.slane %v1766, %v1772
          %v1775 = vsub.f32 %v1734, %v1773
          %v1776 = vmul.f32 %v1775, %v1775
          %v1779 = vunpack.c.l.s4 1983009808
          %v1780 = vunpack.c.0.s8 %v1779
          %v1781 = vlaneseq
          %v1782 = vshrl.u32 %v1781, 7
          %v1783 = vsub.s32 %v1780, %v1782
          %v1784 = vrot.slane %v1776, %v1783
          %v1785 = vcombine.high %v1784, %v1784
          %v1788 = vsel %vm1746, %v1784, 0.0
          %v1789 = vrot.slane %v1788, 4
          %v1790 = vadd.f32 %v1788, %v1789
          %v1791 = vrot.slane %v1790, 2
          %v1792 = vadd.f32 %v1790, %v1791
          %v1793 = vrot.slane %v1792, 1
          %v1794 = vadd.f32 %v1792, %v1793
          %v1795 = vsel %vm1746, %v1785, 0.0
          %v1796 = vrot.slane %v1795, 4
          %v1797 = vadd.f32 %v1795, %v1796
          %v1798 = vrot.slane %v1797, 2
          %v1799 = vadd.f32 %v1797, %v1798
          %v1800 = vrot.slane %v1799, 1
          %v1801 = vadd.f32 %v1799, %v1800
          %v1802 = vmul.f32 %v1794, %v1761
          %v1803 = vmul.f32 %v1801, %v1761
          %v1804 = vadd.f32 %v1802, 1e-05
          %v1805 = vadd.f32 %v1803, 1e-05
          %v1806 = vrsqrt.pop %v1804
          %v1807 = vrsqrt.pop %v1805
          %v1810 = vcombine.low %v1806, %v1807
          %v1812 = vunpack.c.l.s4 1983009808
          %v1813 = vunpack.c.0.s8 %v1812
          %v1814 = vlaneseq
          %v1815 = vshrl.u32 %v1814, 7
          %v1816 = vsub.s32 %v1813, %v1815
          %v1817 = vrot.slane %v1810, %v1816
          %v1819 = vmul.f32 %v1775, %v1817
          %v1820 = vld [vmem:[#allocation11] sm:$0x3]
          %v1822 = vlaneseq
          %v1823 = vshrl.u32 %v1822, 7
          %v1824 = vsub.s32 0, %v1823
          %v1825 = vrot.slane %v1820, %v1824
          %v1826 = vlaneseq
          %v1827 = vshrl.u32 %v1826, 7
          %v1828 = vsub.s32 1, %v1827
          %v1829 = vrot.slane %v1820, %v1828
          %v1830 = vcombine.low %v1825, %v1829
          %v1832 = vunpack.c.l.s4 1983009808
          %v1833 = vunpack.c.0.s8 %v1832
          %v1834 = vlaneseq
          %v1835 = vshrl.u32 %v1834, 7
          %v1836 = vsub.s32 %v1833, %v1835
          %v1837 = vrot.slane %v1830, %v1836
          %v1839 = vmul.f32 %v1819, %v1837
          %v1840 = vld [vmem:[#allocation12] sm:$0x3]
          %v1842 = vlaneseq
          %v1843 = vshrl.u32 %v1842, 7
          %v1844 = vsub.s32 0, %v1843
          %v1845 = vrot.slane %v1840, %v1844
          %v1846 = vlaneseq
          %v1847 = vshrl.u32 %v1846, 7
          %v1848 = vsub.s32 1, %v1847
          %v1849 = vrot.slane %v1840, %v1848
          %v1850 = vcombine.low %v1845, %v1849
          %v1852 = vunpack.c.l.s4 1983009808
          %v1853 = vunpack.c.0.s8 %v1852
          %v1854 = vlaneseq
          %v1855 = vshrl.u32 %v1854, 7
          %v1856 = vsub.s32 %v1853, %v1855
          %v1857 = vrot.slane %v1850, %v1856
          %v1859 = vadd.f32 %v1839, %v1857
          %vm1860 = vcmp.gt.f32.partialorder %v1859, 0.0
          %v1861 = vmul.f32 %v1859, 0.2
          %v1862 = vsel %vm1860, %v1859, %v1861
          %v1863 = vld [vmem:[%s8] sm:$0xff]
          %v1864 = vld [vmem:[%s8 + $0x8] sm:$0xff]
          %v1865 = vld [vmem:[%s8 + $0x10] sm:$0xff]
          %v1866 = vld [vmem:[%s8 + $0x18] sm:$0xff]
          %v1867 = vld [vmem:[%s8 + $0x20] sm:$0xff]
          %v1868 = vld [vmem:[%s8 + $0x28] sm:$0xff]
          %v1869 = vld [vmem:[%s8 + $0x30] sm:$0xff]
          %v1870 = vld [vmem:[%s8 + $0x38] sm:$0xff]
          %v1871 = vld [vmem:[%s8 + $0x40] sm:$0xff]
          %v1872 = vld [vmem:[%s8 + $0x48] sm:$0xff]
          %v1873 = vld [vmem:[%s8 + $0x50] sm:$0xff]
          %v1874 = vld [vmem:[%s8 + $0x58] sm:$0xff]
          %v1875 = vld [vmem:[%s8 + $0x60] sm:$0xff]
          %v1876 = vld [vmem:[%s8 + $0x68] sm:$0xff]
          %v1877 = vld [vmem:[%s8 + $0x70] sm:$0xff]
          %v1878 = vld [vmem:[%s8 + $0x78] sm:$0xff]
          %v1879 = vld [vmem:[%s8 + $0x80] sm:$0xff]
          %v1880 = vld [vmem:[%s8 + $0x88] sm:$0xff]
          %v1881 = vld [vmem:[%s8 + $0x90] sm:$0xff]
          %v1882 = vld [vmem:[%s8 + $0x98] sm:$0xff]
          %v1883 = vld [vmem:[%s8 + $0xa0] sm:$0xff]
          %v1884 = vld [vmem:[%s8 + $0xa8] sm:$0xff]
          %v1885 = vld [vmem:[%s8 + $0xb0] sm:$0xff]
          %v1886 = vld [vmem:[%s8 + $0xb8] sm:$0xff]
          %v1887 = vld [vmem:[%s8 + $0xc0] sm:$0xff]
          %v1888 = vld [vmem:[%s8 + $0xc8] sm:$0xff]
          %v1889 = vld [vmem:[%s8 + $0xd0] sm:$0xff]
          %v1890 = vld [vmem:[%s8 + $0xd8] sm:$0xff]
          %v1891 = vld [vmem:[%s8 + $0xe0] sm:$0xff]
          %v1892 = vld [vmem:[%s8 + $0xe8] sm:$0xff]
          %v1893 = vld [vmem:[%s8 + $0xf0] sm:$0xff]
          %v1894 = vld [vmem:[%s8 + $0xf8] sm:$0xff]
          %v1895 = vld [vmem:[#allocation14] sm:$0x1]
          %v1897 = vlaneseq
          %v1898 = vshrl.u32 %v1897, 7
          %v1899 = vsub.s32 0, %v1898
          %v1900 = vrot.slane %v1895, %v1899
          %v1904 = vunpack.c.l.s4 1983009808
          %v1905 = vunpack.c.0.s8 %v1904
          %v1906 = vlaneseq
          %v1907 = vshrl.u32 %v1906, 7
          %v1908 = vsub.s32 %v1905, %v1907
          %v1909 = vrot.slane %v1862, %v1908
          %v1910 = vcombine.high %v1909, %v1909
          %1913 = vmatprep.subr.mxu0 0.0
          %1914 = vmatpush1.msra.mxu0 %v1878
          %1915 = vmatprep.subr.mxu0 0.0
          %1916 = vmatpush1.msra.mxu0 %v1877
          %1917 = vmatprep.subr.mxu0 0.0
          %1918 = vmatpush1.msra.mxu0 %v1876
          %1919 = vmatprep.subr.mxu0 0.0
          %1920 = vmatpush1.msra.mxu0 %v1875
          %1921 = vmatprep.subr.mxu0 0.0
          %1922 = vmatpush1.msra.mxu0 %v1874
          %1923 = vmatprep.subr.mxu0 0.0
          %1924 = vmatpush1.msra.mxu0 %v1873
          %1925 = vmatprep.subr.mxu0 0.0
          %1926 = vmatpush1.msra.mxu0 %v1872
          %1927 = vmatprep.subr.mxu0 0.0
          %1928 = vmatpush1.msra.mxu0 %v1871
          %1929 = vmatprep.subr.mxu0 0.0
          %1930 = vmatpush1.msra.mxu0 %v1870
          %1931 = vmatprep.subr.mxu0 0.0
          %1932 = vmatpush1.msra.mxu0 %v1869
          %1933 = vmatprep.subr.mxu0 0.0
          %1934 = vmatpush1.msra.mxu0 %v1868
          %1935 = vmatprep.subr.mxu0 0.0
          %1936 = vmatpush1.msra.mxu0 %v1867
          %1937 = vmatprep.subr.mxu0 0.0
          %1938 = vmatpush1.msra.mxu0 %v1866
          %1939 = vmatprep.subr.mxu0 0.0
          %1940 = vmatpush1.msra.mxu0 %v1865
          %1941 = vmatprep.subr.mxu0 0.0
          %1942 = vmatpush1.msra.mxu0 %v1864
          %1943 = vmatprep.subr.mxu0 0.0
          %1944 = vmatpush1.msra.mxu0 %v1863
          %1945 = vmatprep.subr.mxu0 0.0
          %1946 = vmatpush2.msra.mxu0 %v1894
          %1947 = vmatprep.subr.mxu0 0.0
          %1948 = vmatpush2.msra.mxu0 %v1893
          %1949 = vmatprep.subr.mxu0 0.0
          %1950 = vmatpush2.msra.mxu0 %v1892
          %1951 = vmatprep.subr.mxu0 0.0
          %1952 = vmatpush2.msra.mxu0 %v1891
          %1953 = vmatprep.subr.mxu0 0.0
          %1954 = vmatpush2.msra.mxu0 %v1890
          %1955 = vmatprep.subr.mxu0 0.0
          %1956 = vmatpush2.msra.mxu0 %v1889
          %1957 = vmatprep.subr.mxu0 0.0
          %1958 = vmatpush2.msra.mxu0 %v1888
          %1959 = vmatprep.subr.mxu0 0.0
          %1960 = vmatpush2.msra.mxu0 %v1887
          %1961 = vmatprep.subr.mxu0 0.0
          %1962 = vmatpush2.msra.mxu0 %v1886
          %1963 = vmatprep.subr.mxu0 0.0
          %1964 = vmatpush2.msra.mxu0 %v1885
          %1965 = vmatprep.subr.mxu0 0.0
          %1966 = vmatpush2.msra.mxu0 %v1884
          %1967 = vmatprep.subr.mxu0 0.0
          %1968 = vmatpush2.msra.mxu0 %v1883
          %1969 = vmatprep.subr.mxu0 0.0
          %1970 = vmatpush2.msra.mxu0 %v1882
          %1971 = vmatprep.subr.mxu0 0.0
          %1972 = vmatpush2.msra.mxu0 %v1881
          %1973 = vmatprep.subr.mxu0 0.0
          %1974 = vmatpush2.msra.mxu0 %v1880
          %1975 = vmatprep.subr.mxu0 0.0
          %1976 = vmatpush2.msra.mxu0 %v1879
          %1977 = vmatprep.mubr.f32.mxu0 %v1910
          %1978 = vmatmul.mubr.f32.gmra.mxu0 %v1909
          %v1979 = vpop.f32.mrf.mxu0
          %v1980 = vadd.f32 %v1900, %v1979
          %v1981 = vpop.f32.mrf.mxu0
          %1982 = vdwg.mxu0
          %vm1983 = vcmask 66560
          %v1984 = vsel %vm1983, %v1980, 0.0
          %v1985 = vrot.slane %v1984, 4
          %v1986 = vadd.f32 %v1984, %v1985
          %v1987 = vrot.slane %v1986, 2
          %v1988 = vadd.f32 %v1986, %v1987
          %v1989 = vrot.slane %v1988, 1
          %v1990 = vadd.f32 %v1988, %v1989
          %v1991 = vmul.f32 %v1990, %v1761
          %v1992 = vsub.f32 %v1980, %v1991
          %v1993 = vmul.f32 %v1992, %v1992
          %v1994 = vsel %vm1983, %v1993, 0.0
          %v1995 = vrot.slane %v1994, 4
          %v1996 = vadd.f32 %v1994, %v1995
          %v1997 = vrot.slane %v1996, 2
          %v1998 = vadd.f32 %v1996, %v1997
          %v1999 = vrot.slane %v1998, 1
          %v2000 = vadd.f32 %v1998, %v1999
          %v2001 = vmul.f32 %v2000, %v1761
          %v2002 = vadd.f32 %v2001, 1e-05
          %v2003 = vrsqrt.pop %v2002
          %v2004 = vmul.f32 %v1992, %v2003
          %v2005 = vld [vmem:[#allocation15] sm:$0x1]
          %v2007 = vlaneseq
          %v2008 = vshrl.u32 %v2007, 7
          %v2009 = vsub.s32 0, %v2008
          %v2010 = vrot.slane %v2005, %v2009
          %v2012 = vmul.f32 %v2004, %v2010
          %v2013 = vld [vmem:[#allocation17] sm:$0x1]
          %v2015 = vlaneseq
          %v2016 = vshrl.u32 %v2015, 7
          %v2017 = vsub.s32 0, %v2016
          %v2018 = vrot.slane %v2013, %v2017
          %v2020 = vadd.f32 %v2012, %v2018
          %vm2021 = vcmp.gt.f32.partialorder %v2020, 0.0
          %v2022 = vmul.f32 %v2020, 0.2
          %v2023 = vsel %vm2021, %v2020, %v2022
          %v2024 = vld [vmem:[%s12] sm:$0xff]
          %v2025 = vld [vmem:[%s12 + $0x8] sm:$0x3]
          %v2026 = vld [vmem:[%s2] sm:$0x3]
          %2028 = vset.pattern.permute.xlu0 0
          %2029 = vperm.xlu0 %2028, %v2026
          %v2030 = vpop.permute.xlu0 %2029
          %v2032 = vlaneseq
          %v2033 = vshrl.u32 %v2032, 7
          %v2034 = vsub.s32 1, %v2033
          %v2035 = vrot.slane %v2025, %v2034
          %v2036 = vmul.f32 %v2030, %v2035
          %vm2037 = vcmask 72704
          %v2039 = vsel %vm2037, %v2023, 0
          %vm2041 = vcmask 1040384
          %v2043 = vsel %vm2041, %v2025, 0
          %2045 = vmatprep.subr.mxu0 0.0
          %2046 = vmatpush1.msra.mxu0 0.0
          %2047 = vmatprep.subr.mxu0 0.0
          %2048 = vmatpush1.msra.mxu0 0.0
          %2049 = vmatprep.subr.mxu0 0.0
          %2050 = vmatpush1.msra.mxu0 0.0
          %2051 = vmatprep.subr.mxu0 0.0
          %2052 = vmatpush1.msra.mxu0 0.0
          %2053 = vmatprep.subr.mxu0 0.0
          %2054 = vmatpush1.msra.mxu0 0.0
          %2055 = vmatprep.subr.mxu0 0.0
          %2056 = vmatpush1.msra.mxu0 0.0
          %2057 = vmatprep.subr.mxu0 0.0
          %2058 = vmatpush1.msra.mxu0 0.0
          %2059 = vmatprep.subr.mxu0 0.0
          %2060 = vmatpush1.msra.mxu0 0.0
          %2061 = vmatprep.subr.mxu0 0.0
          %2062 = vmatpush1.msra.mxu0 0.0
          %2063 = vmatprep.subr.mxu0 0.0
          %2064 = vmatpush1.msra.mxu0 0.0
          %2065 = vmatprep.subr.mxu0 0.0
          %2066 = vmatpush1.msra.mxu0 0.0
          %2067 = vmatprep.subr.mxu0 0.0
          %2068 = vmatpush1.msra.mxu0 0.0
          %2069 = vmatprep.subr.mxu0 0.0
          %2070 = vmatpush1.msra.mxu0 0.0
          %2071 = vmatprep.subr.mxu0 0.0
          %2072 = vmatpush1.msra.mxu0 0.0
          %2073 = vmatprep.subr.mxu0 0.0
          %2074 = vmatpush1.msra.mxu0 %v2043
          %2075 = vmatprep.subr.mxu0 0.0
          %2076 = vmatpush1.msra.mxu0 %v2024
          %2077 = vmatprep.subr.mxu0 0.0
          %2078 = vmatpush2.msra.mxu0 0.0
          %2079 = vmatprep.subr.mxu0 0.0
          %2080 = vmatpush2.msra.mxu0 0.0
          %2081 = vmatprep.subr.mxu0 0.0
          %2082 = vmatpush2.msra.mxu0 0.0
          %2083 = vmatprep.subr.mxu0 0.0
          %2084 = vmatpush2.msra.mxu0 0.0
          %2085 = vmatprep.subr.mxu0 0.0
          %2086 = vmatpush2.msra.mxu0 0.0
          %2087 = vmatprep.subr.mxu0 0.0
          %2088 = vmatpush2.msra.mxu0 0.0
          %2089 = vmatprep.subr.mxu0 0.0
          %2090 = vmatpush2.msra.mxu0 0.0
          %2091 = vmatprep.subr.mxu0 0.0
          %2092 = vmatpush2.msra.mxu0 0.0
          %2093 = vmatprep.subr.mxu0 0.0
          %2094 = vmatpush2.msra.mxu0 0.0
          %2095 = vmatprep.subr.mxu0 0.0
          %2096 = vmatpush2.msra.mxu0 0.0
          %2097 = vmatprep.subr.mxu0 0.0
          %2098 = vmatpush2.msra.mxu0 0.0
          %2099 = vmatprep.subr.mxu0 0.0
          %2100 = vmatpush2.msra.mxu0 0.0
          %2101 = vmatprep.subr.mxu0 0.0
          %2102 = vmatpush2.msra.mxu0 0.0
          %2103 = vmatprep.subr.mxu0 0.0
          %2104 = vmatpush2.msra.mxu0 0.0
          %2105 = vmatprep.subr.mxu0 0.0
          %2106 = vmatpush2.msra.mxu0 0.0
          %2107 = vmatprep.subr.mxu0 0.0
          %2108 = vmatpush2.msra.mxu0 0.0
          %2109 = vmatprep.mubr.f32.mxu0 0.0
          %2110 = vmatmul.mubr.f32.gmra.mxu0 %v2039
          %v2111 = vpop.f32.mrf.mxu0
          %v2112 = vadd.f32 %v2036, %v2111
          %v2113 = vpop.f32.mrf.mxu0
          %2114 = vdwg.mxu0
          %v2115 = vld [vmem:[#allocation18] sm:$0x1]
          %v2117 = vlaneseq
          %v2118 = vshrl.u32 %v2117, 7
          %v2119 = vsub.s32 0, %v2118
          %v2120 = vrot.slane %v2115, %v2119
          %v2122 = vadd.f32 %v2112, %v2120
          %vm2123 = vcmask 58368
          %v2124 = vsel %vm2123, %v2122, -inf
          %2125 = vmax.xlane.f32.xlu0 %v2124
          %v2126 = vpop.xlane.xlu0 %2125
          %v2127 = vsub.f32 %v2122, %v2126
          %v2128 = vmul.f32 %v2127, 1.442695
          %v2129 = vpow.pop %v2128
          %v2130 = vsel %vm2123, %v2129, 0.0
          %2131 = vadd.xlane.f32.xlu0 %v2130
          %v2132 = vpop.xlane.xlu0 %2131
          %v2133 = vrcp.pop %v2132
          %v2134 = vmul.f32 %v2129, %v2133
          %2135 = vst.msk [vmem:[#allocation20] sm:$0x3] %vm2123, %v2134
        $region124: #{nasnet_wrapper_forward.1} parent=75 // pred_fallthru
          _
        // Predicated region
        $region125: #{nasnet_wrapper_forward.1} parent=75 // pred_check
          %p2136 = pneg %p351
        $region126: #{nasnet_wrapper_forward.1} parent=75 // pred_check_branch
          %2138 = sbr.rel (%p2136) target = $region128
        $region127: #{nasnet_wrapper_forward.1} parent=75 // pred_region
          %s2140 = ssub.s32 32, 32
          %2141 = vsyncadd [#allocation5], %s2140
          %s2143 = sshll.u32 [#allocation20], 4
          %s2144 = int_to_ptr.vmem [resolvable:$true] %s2143
          %2146 = dma.vmem_to_hbm [thread:$0]  %s2144, 32, %s14, [#allocation5]
        $region128: #{nasnet_wrapper_forward.1} parent=75 // pred_fallthru
          _
        // Predicated region
        $region129: #{nasnet_wrapper_forward.1} parent=75 // pred_check
          %p2147 = pneg %p351
        $region130: #{nasnet_wrapper_forward.1} parent=75 // pred_check_branch
          %2149 = sbr.rel (%p2147) target = $region132
        $region131: #{nasnet_wrapper_forward.1} parent=75 // pred_region
          %2150 = dma.done [#allocation5], 32
        $region132: #{nasnet_wrapper_forward.1} parent=75 // pred_fallthru
          _
      $region76: #{nasnet_wrapper_forward.1} parent=5 // pred_fallthru
        _
      %p2151 = scmp.le.s32.totalorder 2, %s29
      // Predicated region
      $region133: #{nasnet_wrapper_forward.1} parent=5 // pred_check
        %p2152 = pneg %p2151
      $region134: #{nasnet_wrapper_forward.1} parent=5 // pred_check_branch
        %2154 = sbr.rel (%p2152) target = $region136
      $region135: #{nasnet_wrapper_forward.1} parent=5 // pred_region
        %s2155 = ssub.s32 %s29, 2
      $region136: #{nasnet_wrapper_forward.1} parent=5 // pred_fallthru
        _
    $region6: #{nasnet_wrapper_forward.1} parent=1 // loop_footer
      %s33 = sadd.s32 1, %s29
    $region7: #{nasnet_wrapper_forward.1} parent=1 // loop_footer_branch
      %28 = sbr.rel target = $region3
    $region8: #{nasnet_wrapper_forward.1} parent=1 // loop_exit
      _
    %2156 = vsyncpa [#allocation4], 1
    %s2157 = scalar_lea.sflag [#allocation4], 1
    %2158 = vsyncpa %s2157, 1
    %2159 = vsyncpa [#allocation7], 1
    %2160 = vsyncpa [#allocation10], 1
    %2161 = vsyncpa [#allocation13], 1
    %2162 = vsyncpa [#allocation16], 1
    %2163 = vsyncpa [#allocation19], 1
    %2164 = vsyncpa [#allocation5], 1
    %s2165 = scalar_lea.sflag [#allocation5], 1
    %2166 = vsyncpa %s2165, 1

</llo_original>
